<compile_context>
chip_gen: v7x
topology: tpu7x:2x2x1
jax: 0.10.0
libtpu: 0.0.40
codegen_flags: <defaults>
</compile_context>

<pallas_src>
import functools

import jax
import jax.numpy as jnp
from jax.experimental import pallas as pl
from jax.experimental.pallas import tpu as pltpu

EPS = 1e-5      # PyTorch BatchNorm1d default
PAD = 3         # Conv1d padding in the module


def _se_scale(h_cl, w1, b1, w2, b2):
    """SE gate for one batch row, channels-on-sublanes (no relayout needed).

    h_cl: (C, L);  w1: (C//8, C); b1: (C//8, 1); w2: (C, C//8); b2: (C, 1)
    returns (C, 1) sigmoid scale.
    """
    p = jnp.mean(h_cl, axis=1, keepdims=True)                       # (C, 1)
    z = jnp.maximum(
        jnp.dot(w1, p, preferred_element_type=jnp.float32) + b1, 0.0)
    return jax.nn.sigmoid(
        jnp.dot(w2, z, preferred_element_type=jnp.float32) + b2)


# ----------------------------------------------------------------------------
# Fused RE_block kernel (single invocation, everything resident in VMEM)
# ----------------------------------------------------------------------------
def re_block_fused_kernel(x_ref, w1_ref, g1_ref, bt1_ref,
                          w2_ref, g2_ref, bt2_ref,
                          sew1_ref, seb1_ref, sew2_ref, seb2_ref,
                          out_ref, xpad_ref, xcol_ref, *, dilation):
    # x_ref   : (N, C, L)        f32   residual + conv1 input (NCL, L on lanes)
    # w1/w2   : (C, K*C)         bf16  conv slabs, [co, k*C + ci] = w[co, ci, k]
    # g*/bt*  : (C, 1)           f32   BN affine (broadcast over N, L)
    # sew1/seb1: (C//8, C)/(C//8, 1)  f32  SE squeeze 1x1 conv (transposed)
    # sew2/seb2: (C, C//8)/(C, 1)     f32  SE excite 1x1 conv (transposed)
    # out_ref : (N, C, L)        f32
    # xpad_ref: (N, C, L+2*PAD)  bf16  zero-halo staging scratch
    # xcol_ref: (N, K*C, L)      bf16  im2col scratch (shared by both convs)
    N, C, L = out_ref.shape
    K = xcol_ref.shape[1] // C

    # Zero ONLY the halo margins, once.  The bulk region [PAD : PAD+L] is
    # fully overwritten by each staging store, so the margins stay zero for
    # conv2 as well (this realises Conv1d's zero padding).
    xpad_ref[:, :, :PAD] = jnp.zeros((N, C, PAD), jnp.bfloat16)
    xpad_ref[:, :, PAD + L:] = jnp.zeros((N, C, PAD), jnp.bfloat16)

    def stage_and_im2col(src_ncl_f32):
        # One bf16 cast + one bulk store into the halo scratch ...
        xpad_ref[:, :, PAD:PAD + L] = src_ncl_f32.astype(jnp.bfloat16)
        # ... then K lane-shifted copies stacked along sublanes.  Sublane
        # offsets k*C are multiples of 16 (aligned bf16 sublane tiles); the
        # small lane shifts are XLU work and overlap the MXU.
        for k in range(K):
            off = k * dilation
            xcol_ref[:, k * C:(k + 1) * C, :] = xpad_ref[:, :, off:off + L]

    def conv_bn_relu(w_ref, g_ref, bt_ref):
        # One deep (K*C)-contraction matmul per batch row: (C, K*C) @ (K*C, L),
        # bf16 operands, f32 accumulation.
        w = w_ref[...]
        y = jnp.stack(
            [jax.lax.dot_general(w, xcol_ref[n], (((1,), (0,)), ((), ())),
                                 preferred_element_type=jnp.float32)
             for n in range(N)], axis=0)                     # (N, C, L) f32
        # Training-mode BatchNorm1d: stats over (N, L) per channel, biased
        # variance, affine.  No conv bias needed: the mean subtraction below
        # cancels a per-channel constant exactly.
        mu = jnp.mean(y, axis=(0, 2), keepdims=True)
        var = jnp.mean((y - mu) ** 2, axis=(0, 2), keepdims=True)
        y = (y - mu) * jax.lax.rsqrt(var + EPS) * g_ref[...] + bt_ref[...]
        return jnp.maximum(y, 0.0)

    # ---- conv1 + BN1 + ReLU ------------------------------------------------
    stage_and_im2col(x_ref[...])
    h1 = conv_bn_relu(w1_ref, g1_ref, bt1_ref)               # (N, C, L)

    # ---- conv2 + BN2 + ReLU (reuse the same scratches) ----------------------
    stage_and_im2col(h1)
    h2 = conv_bn_relu(w2_ref, g2_ref, bt2_ref)               # (N, C, L)

    # ---- SE block + both residual adds, all in NCL --------------------------
    s = jnp.stack(
        [_se_scale(h2[n], sew1_ref[...], seb1_ref[...],
                   sew2_ref[...], seb2_ref[...]) for n in range(N)],
        axis=0)                                              # (N, C, 1)
    out_ref[...] = (x_ref[...] + h2 + s).astype(out_ref.dtype)


# ----------------------------------------------------------------------------
# RE_block forward (wrapper; PyTorch NCL layout in and out, no transposes)
# ----------------------------------------------------------------------------
def re_block_forward(x_ncl, params, *, dilation):
    N, C, L = x_ncl.shape
    K = params["w1"].shape[2]
    assert dilation * (K - 1) == 2 * PAD, (
        "RE_block residual requires length-preserving convs "
        "(dilation * (kernel_size - 1) == 6)")

    def conv_slab(w_oik):        # (Cout, Cin, K) -> (Cout, K*Cin) bf16
        co, ci, k = w_oik.shape
        return (jnp.transpose(w_oik, (0, 2, 1))
                .reshape(co, k * ci).astype(jnp.bfloat16))

    vmem = pl.BlockSpec(memory_space=pltpu.MemorySpace.VMEM)
    return pl.pallas_call(
        functools.partial(re_block_fused_kernel, dilation=dilation),
        out_shape=jax.ShapeDtypeStruct((N, C, L), jnp.float32),
        in_specs=[vmem] * 11,
        out_specs=vmem,
        scratch_shapes=[
            pltpu.VMEM((N, C, L + 2 * PAD), jnp.bfloat16),   # zero-halo staging
            pltpu.VMEM((N, K * C, L), jnp.bfloat16),         # im2col slab
        ],
        compiler_params=pltpu.CompilerParams(
            vmem_limit_bytes=32 * 1024 * 1024),
    )(x_ncl.astype(jnp.float32),
      conv_slab(params["w1"]),
      params["g1"].reshape(C, 1), params["bt1"].reshape(C, 1),
      conv_slab(params["w2"]),
      params["g2"].reshape(C, 1), params["bt2"].reshape(C, 1),
      jnp.transpose(params["se_w1"]), params["se_b1"].reshape(-1, 1),
      jnp.transpose(params["se_w2"]), params["se_b2"].reshape(-1, 1))
    # NOTE: conv biases b1/b2 are intentionally NOT passed to the kernel --
    # training-mode BatchNorm's mean subtraction cancels them exactly.


# ----------------------------------------------------------------------------
# Pure-JAX reference (PyTorch NCL layout, biases included as in the module).
# conv_input_dtype=bf16 mirrors the kernel's MXU operand precision (f32 acc).
# ----------------------------------------------------------------------------
def re_block_reference(x_ncl, params, *, dilation,
                       conv_input_dtype=jnp.bfloat16):
    def cbr(x, w_oik, b, g, bt):
        y = jax.lax.conv_general_dilated(
            x.astype(conv_input_dtype), w_oik.astype(conv_input_dtype),
            window_strides=(1,), padding=[(PAD, PAD)], rhs_dilation=(dilation,),
            dimension_numbers=("NCH", "OIH", "NCH"),
            preferred_element_type=jnp.float32,
            precision=jax.lax.Precision.HIGHEST)
        y = y + b[None, :, None]
        mu = y.mean(axis=(0, 2), keepdims=True)
        var = ((y - mu) ** 2).mean(axis=(0, 2), keepdims=True)
        y = (y - mu) * jax.lax.rsqrt(var + EPS) * g[None, :, None] + bt[None, :, None]
        return jnp.maximum(y, 0.0)

    h = cbr(x_ncl, params["w1"], params["b1"], params["g1"], params["bt1"])
    h = cbr(h, params["w2"], params["b2"], params["g2"], params["bt2"])
    pooled = h.mean(axis=2)                                        # (N, C)
    z = jnp.maximum(pooled @ params["se_w1"] + params["se_b1"], 0.0)
    s = jax.nn.sigmoid(z @ params["se_w2"] + params["se_b2"])      # (N, C)
    return x_ncl + (h + s[:, :, None])


# ----------------------------------------------------------------------------
if __name__ == "__main__":
    # in_layer = out_layer = 16, kernel_size = 7, dilation = 1 (length kept)
    N, C, L, K, DIL = 2, 16, 32, 7, 1
    C8 = C // 8

    ks = jax.random.split(jax.random.PRNGKey(0), 13)
    params = {
        # conv weights in PyTorch layout (Cout, Cin, K); biases/BN affine (C,)
        "w1": 0.1 * jax.random.normal(ks[0], (C, C, K), jnp.float32),
        "b1": 0.1 * jax.random.normal(ks[1], (C,), jnp.float32),
        "g1": 1.0 + 0.1 * jax.random.normal(ks[2], (C,), jnp.float32),
        "bt1": 0.1 * jax.random.normal(ks[3], (C,), jnp.float32),
        "w2": 0.1 * jax.random.normal(ks[4], (C, C, K), jnp.float32),
        "b2": 0.1 * jax.random.normal(ks[5], (C,), jnp.float32),
        "g2": 1.0 + 0.1 * jax.random.normal(ks[6], (C,), jnp.float32),
        "bt2": 0.1 * jax.random.normal(ks[7], (C,), jnp.float32),
        # SE 1x1 convs stored as (Cin, Cout) matmul weights
        "se_w1": 0.1 * jax.random.normal(ks[8], (C, C8), jnp.float32),
        "se_b1": 0.1 * jax.random.normal(ks[9], (C8,), jnp.float32),
        "se_w2": 0.1 * jax.random.normal(ks[10], (C8, C), jnp.float32),
        "se_b2": 0.1 * jax.random.normal(ks[11], (C,), jnp.float32),
    }
    x = jax.random.normal(ks[12], (N, C, L), jnp.float32)

    fwd = jax.jit(functools.partial(re_block_forward, dilation=DIL))
    out = jax.block_until_ready(fwd(x, params))

    ref = jax.block_until_ready(re_block_reference(x, params, dilation=DIL))
    assert out.shape == (N, C, L)
    err = float(jnp.max(jnp.abs(out - ref)))
    # bf16 MXU operands are mirrored in the reference, so agreement is tight;
    # 2e-2 leaves ample headroom for accumulation-order / rounding deltas.
    assert jnp.allclose(out, ref, atol=2e-2, rtol=2e-2), f"max err {err}"
    print("KERNEL_OK")
</pallas_src>

<mosaic_0001>
module attributes {stable_mosaic.version = 11 : i64} {
  func.func @re_block_fused_kernel(%arg0: memref<2x16x32xf32, #tpu.memory_space<vmem>>, %arg1: memref<16x112xbf16, #tpu.memory_space<vmem>>, %arg2: memref<16x1xf32, #tpu.memory_space<vmem>>, %arg3: memref<16x1xf32, #tpu.memory_space<vmem>>, %arg4: memref<16x112xbf16, #tpu.memory_space<vmem>>, %arg5: memref<16x1xf32, #tpu.memory_space<vmem>>, %arg6: memref<16x1xf32, #tpu.memory_space<vmem>>, %arg7: memref<2x16xf32, #tpu.memory_space<vmem>>, %arg8: memref<2x1xf32, #tpu.memory_space<vmem>>, %arg9: memref<16x2xf32, #tpu.memory_space<vmem>>, %arg10: memref<16x1xf32, #tpu.memory_space<vmem>>, %arg11: memref<2x16x32xf32, #tpu.memory_space<vmem>>, %arg12: memref<2x16x38xbf16, #tpu.memory_space<vmem>>, %arg13: memref<2x112x32xbf16, #tpu.memory_space<vmem>>) attributes {dimension_semantics = [], scalar_prefetch = 0 : i64, scratch_operands = 2 : i64, tpu.core_type = #tpu.core_type<tc>} {
    %cst = arith.constant 0.000000e+00 : bf16
    %0 = vector.broadcast %cst : bf16 to vector<2x16x3xbf16>
    %c0 = arith.constant 0 : index
    %c0_0 = arith.constant 0 : index
    %c0_1 = arith.constant 0 : index
    %1 = vector.load %arg12[%c0, %c0_0, %c0_1] : memref<2x16x38xbf16, #tpu.memory_space<vmem>>, vector<2x16x3xbf16>
    tpu.vector_store %arg12[%c0, %c0_0, %c0_1], %0 {strides = array<i32>} : memref<2x16x38xbf16, #tpu.memory_space<vmem>>, vector<2x16x3xbf16>,
    %cst_2 = arith.constant 0.000000e+00 : bf16
    %2 = vector.broadcast %cst_2 : bf16 to vector<2x16x3xbf16>
    %c0_3 = arith.constant 0 : index
    %c0_4 = arith.constant 0 : index
    %c35 = arith.constant 35 : index
    %3 = vector.load %arg12[%c0_3, %c0_4, %c35] : memref<2x16x38xbf16, #tpu.memory_space<vmem>>, vector<2x16x3xbf16>
    tpu.vector_store %arg12[%c0_3, %c0_4, %c35], %2 {strides = array<i32>} : memref<2x16x38xbf16, #tpu.memory_space<vmem>>, vector<2x16x3xbf16>,
    %c0_5 = arith.constant 0 : index
    %c0_6 = arith.constant 0 : index
    %c0_7 = arith.constant 0 : index
    %4 = vector.load %arg0[%c0_5, %c0_6, %c0_7] : memref<2x16x32xf32, #tpu.memory_space<vmem>>, vector<2x16x32xf32>
    %5 = arith.truncf %4 : vector<2x16x32xf32> to vector<2x16x32xbf16>
    %c0_8 = arith.constant 0 : index
    %c0_9 = arith.constant 0 : index
    %c3 = arith.constant 3 : index
    %6 = vector.load %arg12[%c0_8, %c0_9, %c3] : memref<2x16x38xbf16, #tpu.memory_space<vmem>>, vector<2x16x32xbf16>
    tpu.vector_store %arg12[%c0_8, %c0_9, %c3], %5 {strides = array<i32>} : memref<2x16x38xbf16, #tpu.memory_space<vmem>>, vector<2x16x32xbf16>,
    %c0_10 = arith.constant 0 : index
    %c0_11 = arith.constant 0 : index
    %c0_12 = arith.constant 0 : index
    %7 = vector.load %arg12[%c0_10, %c0_11, %c0_12] : memref<2x16x38xbf16, #tpu.memory_space<vmem>>, vector<2x16x32xbf16>
    %c0_13 = arith.constant 0 : index
    %c0_14 = arith.constant 0 : index
    %c0_15 = arith.constant 0 : index
    %8 = vector.load %arg13[%c0_13, %c0_14, %c0_15] : memref<2x112x32xbf16, #tpu.memory_space<vmem>>, vector<2x16x32xbf16>
    tpu.vector_store %arg13[%c0_13, %c0_14, %c0_15], %7 {strides = array<i32>} : memref<2x112x32xbf16, #tpu.memory_space<vmem>>, vector<2x16x32xbf16>,
    %c0_16 = arith.constant 0 : index
    %c0_17 = arith.constant 0 : index
    %c1 = arith.constant 1 : index
    %9 = vector.load %arg12[%c0_16, %c0_17, %c1] : memref<2x16x38xbf16, #tpu.memory_space<vmem>>, vector<2x16x32xbf16>
    %c0_18 = arith.constant 0 : index
    %c16 = arith.constant 16 : index
    %c0_19 = arith.constant 0 : index
    %10 = vector.load %arg13[%c0_18, %c16, %c0_19] : memref<2x112x32xbf16, #tpu.memory_space<vmem>>, vector<2x16x32xbf16>
    tpu.vector_store %arg13[%c0_18, %c16, %c0_19], %9 {strides = array<i32>} : memref<2x112x32xbf16, #tpu.memory_space<vmem>>, vector<2x16x32xbf16>,
    %c0_20 = arith.constant 0 : index
    %c0_21 = arith.constant 0 : index
    %c2 = arith.constant 2 : index
    %11 = vector.load %arg12[%c0_20, %c0_21, %c2] : memref<2x16x38xbf16, #tpu.memory_space<vmem>>, vector<2x16x32xbf16>
    %c0_22 = arith.constant 0 : index
    %c32 = arith.constant 32 : index
    %c0_23 = arith.constant 0 : index
    %12 = vector.load %arg13[%c0_22, %c32, %c0_23] : memref<2x112x32xbf16, #tpu.memory_space<vmem>>, vector<2x16x32xbf16>
    tpu.vector_store %arg13[%c0_22, %c32, %c0_23], %11 {strides = array<i32>} : memref<2x112x32xbf16, #tpu.memory_space<vmem>>, vector<2x16x32xbf16>,
    %c0_24 = arith.constant 0 : index
    %c0_25 = arith.constant 0 : index
    %c3_26 = arith.constant 3 : index
    %13 = vector.load %arg12[%c0_24, %c0_25, %c3_26] : memref<2x16x38xbf16, #tpu.memory_space<vmem>>, vector<2x16x32xbf16>
    %c0_27 = arith.constant 0 : index
    %c48 = arith.constant 48 : index
    %c0_28 = arith.constant 0 : index
    %14 = vector.load %arg13[%c0_27, %c48, %c0_28] : memref<2x112x32xbf16, #tpu.memory_space<vmem>>, vector<2x16x32xbf16>
    tpu.vector_store %arg13[%c0_27, %c48, %c0_28], %13 {strides = array<i32>} : memref<2x112x32xbf16, #tpu.memory_space<vmem>>, vector<2x16x32xbf16>,
    %c0_29 = arith.constant 0 : index
    %c0_30 = arith.constant 0 : index
    %c4 = arith.constant 4 : index
    %15 = vector.load %arg12[%c0_29, %c0_30, %c4] : memref<2x16x38xbf16, #tpu.memory_space<vmem>>, vector<2x16x32xbf16>
    %c0_31 = arith.constant 0 : index
    %c64 = arith.constant 64 : index
    %c0_32 = arith.constant 0 : index
    %16 = vector.load %arg13[%c0_31, %c64, %c0_32] : memref<2x112x32xbf16, #tpu.memory_space<vmem>>, vector<2x16x32xbf16>
    tpu.vector_store %arg13[%c0_31, %c64, %c0_32], %15 {strides = array<i32>} : memref<2x112x32xbf16, #tpu.memory_space<vmem>>, vector<2x16x32xbf16>,
    %c0_33 = arith.constant 0 : index
    %c0_34 = arith.constant 0 : index
    %c5 = arith.constant 5 : index
    %17 = vector.load %arg12[%c0_33, %c0_34, %c5] : memref<2x16x38xbf16, #tpu.memory_space<vmem>>, vector<2x16x32xbf16>
    %c0_35 = arith.constant 0 : index
    %c80 = arith.constant 80 : index
    %c0_36 = arith.constant 0 : index
    %18 = vector.load %arg13[%c0_35, %c80, %c0_36] : memref<2x112x32xbf16, #tpu.memory_space<vmem>>, vector<2x16x32xbf16>
    tpu.vector_store %arg13[%c0_35, %c80, %c0_36], %17 {strides = array<i32>} : memref<2x112x32xbf16, #tpu.memory_space<vmem>>, vector<2x16x32xbf16>,
    %c0_37 = arith.constant 0 : index
    %c0_38 = arith.constant 0 : index
    %c6 = arith.constant 6 : index
    %19 = vector.load %arg12[%c0_37, %c0_38, %c6] : memref<2x16x38xbf16, #tpu.memory_space<vmem>>, vector<2x16x32xbf16>
    %c0_39 = arith.constant 0 : index
    %c96 = arith.constant 96 : index
    %c0_40 = arith.constant 0 : index
    %20 = vector.load %arg13[%c0_39, %c96, %c0_40] : memref<2x112x32xbf16, #tpu.memory_space<vmem>>, vector<2x16x32xbf16>
    tpu.vector_store %arg13[%c0_39, %c96, %c0_40], %19 {strides = array<i32>} : memref<2x112x32xbf16, #tpu.memory_space<vmem>>, vector<2x16x32xbf16>,
    %c0_41 = arith.constant 0 : index
    %c0_42 = arith.constant 0 : index
    %21 = vector.load %arg1[%c0_41, %c0_42] : memref<16x112xbf16, #tpu.memory_space<vmem>>, vector<16x112xbf16>
    %c0_43 = arith.constant 0 : index
    %c0_44 = arith.constant 0 : index
    %c0_45 = arith.constant 0 : index
    %22 = vector.load %arg13[%c0_43, %c0_44, %c0_45] : memref<2x112x32xbf16, #tpu.memory_space<vmem>>, vector<1x112x32xbf16>
    %23 = vector.shape_cast %22 : vector<1x112x32xbf16> to vector<112x32xbf16>
    %cst_46 = arith.constant dense<0.000000e+00> : vector<16x32xf32>
    %24 = tpu.matmul %21, %23, %cst_46 {dimension_numbers = #tpu.dot_dimension_numbers<[1], [0], [0], [1], [0, 0, 1, 1], [], []>} : vector<16x112xbf16>, vector<112x32xbf16>, vector<16x32xf32> -> vector<16x32xf32>
    %c1_47 = arith.constant 1 : index
    %c0_48 = arith.constant 0 : index
    %c0_49 = arith.constant 0 : index
    %25 = vector.load %arg13[%c1_47, %c0_48, %c0_49] : memref<2x112x32xbf16, #tpu.memory_space<vmem>>, vector<1x112x32xbf16>
    %26 = vector.shape_cast %25 : vector<1x112x32xbf16> to vector<112x32xbf16>
    %cst_50 = arith.constant dense<0.000000e+00> : vector<16x32xf32>
    %27 = tpu.matmul %21, %26, %cst_50 {dimension_numbers = #tpu.dot_dimension_numbers<[1], [0], [0], [1], [0, 0, 1, 1], [], []>} : vector<16x112xbf16>, vector<112x32xbf16>, vector<16x32xf32> -> vector<16x32xf32>
    %28 = vector.shape_cast %24 : vector<16x32xf32> to vector<1x16x32xf32>
    %29 = vector.shape_cast %27 : vector<16x32xf32> to vector<1x16x32xf32>
    %30 = tpu.concatenate %28, %29 in 0 : vector<1x16x32xf32>, vector<1x16x32xf32> -> vector<2x16x32xf32>
    %cst_51 = arith.constant dense<0.000000e+00> : vector<16xf32>
    %31 = vector.multi_reduction <add>, %30, %cst_51 [0, 2] : vector<2x16x32xf32> to vector<16xf32>
    %32 = vector.shape_cast %31 : vector<16xf32> to vector<1x16x1xf32>
    %cst_52 = arith.constant 6.400000e+01 : f32
    %33 = vector.broadcast %cst_52 : f32 to vector<1x16x1xf32>
    %34 = arith.divf %32, %33 : vector<1x16x1xf32>
    %35 = vector.broadcast %34 : vector<1x16x1xf32> to vector<2x16x32xf32>
    %36 = arith.subf %30, %35 : vector<2x16x32xf32>
    %37 = arith.mulf %36, %36 : vector<2x16x32xf32>
    %cst_53 = arith.constant dense<0.000000e+00> : vector<16xf32>
    %38 = vector.multi_reduction <add>, %37, %cst_53 [0, 2] : vector<2x16x32xf32> to vector<16xf32>
    %39 = vector.shape_cast %38 : vector<16xf32> to vector<1x16x1xf32>
    %cst_54 = arith.constant 6.400000e+01 : f32
    %40 = vector.broadcast %cst_54 : f32 to vector<1x16x1xf32>
    %41 = arith.divf %39, %40 : vector<1x16x1xf32>
    %42 = vector.broadcast %34 : vector<1x16x1xf32> to vector<2x16x32xf32>
    %43 = arith.subf %30, %42 : vector<2x16x32xf32>
    %cst_55 = arith.constant 9.99999974E-6 : f32
    %44 = vector.broadcast %cst_55 : f32 to vector<1x16x1xf32>
    %45 = arith.addf %41, %44 : vector<1x16x1xf32>
    %46 = math.rsqrt %45 : vector<1x16x1xf32>
    %47 = vector.broadcast %46 : vector<1x16x1xf32> to vector<2x16x32xf32>
    %48 = arith.mulf %43, %47 : vector<2x16x32xf32>
    %c0_56 = arith.constant 0 : index
    %c0_57 = arith.constant 0 : index
    %49 = vector.load %arg2[%c0_56, %c0_57] : memref<16x1xf32, #tpu.memory_space<vmem>>, vector<16x1xf32>
    %50 = vector.shape_cast %49 : vector<16x1xf32> to vector<1x16x1xf32>
    %51 = vector.broadcast %50 : vector<1x16x1xf32> to vector<2x16x32xf32>
    %52 = arith.mulf %48, %51 : vector<2x16x32xf32>
    %c0_58 = arith.constant 0 : index
    %c0_59 = arith.constant 0 : index
    %53 = vector.load %arg3[%c0_58, %c0_59] : memref<16x1xf32, #tpu.memory_space<vmem>>, vector<16x1xf32>
    %54 = vector.shape_cast %53 : vector<16x1xf32> to vector<1x16x1xf32>
    %55 = vector.broadcast %54 : vector<1x16x1xf32> to vector<2x16x32xf32>
    %56 = arith.addf %52, %55 : vector<2x16x32xf32>
    %cst_60 = arith.constant 0.000000e+00 : f32
    %57 = vector.broadcast %cst_60 : f32 to vector<2x16x32xf32>
    %58 = arith.maximumf %56, %57 : vector<2x16x32xf32>
    %59 = arith.truncf %58 : vector<2x16x32xf32> to vector<2x16x32xbf16>
    %c0_61 = arith.constant 0 : index
    %c0_62 = arith.constant 0 : index
    %c3_63 = arith.constant 3 : index
    %60 = vector.load %arg12[%c0_61, %c0_62, %c3_63] : memref<2x16x38xbf16, #tpu.memory_space<vmem>>, vector<2x16x32xbf16>
    tpu.vector_store %arg12[%c0_61, %c0_62, %c3_63], %59 {strides = array<i32>} : memref<2x16x38xbf16, #tpu.memory_space<vmem>>, vector<2x16x32xbf16>,
    %c0_64 = arith.constant 0 : index
    %c0_65 = arith.constant 0 : index
    %c0_66 = arith.constant 0 : index
    %61 = vector.load %arg12[%c0_64, %c0_65, %c0_66] : memref<2x16x38xbf16, #tpu.memory_space<vmem>>, vector<2x16x32xbf16>
    %c0_67 = arith.constant 0 : index
    %c0_68 = arith.constant 0 : index
    %c0_69 = arith.constant 0 : index
    %62 = vector.load %arg13[%c0_67, %c0_68, %c0_69] : memref<2x112x32xbf16, #tpu.memory_space<vmem>>, vector<2x16x32xbf16>
    tpu.vector_store %arg13[%c0_67, %c0_68, %c0_69], %61 {strides = array<i32>} : memref<2x112x32xbf16, #tpu.memory_space<vmem>>, vector<2x16x32xbf16>,
    %c0_70 = arith.constant 0 : index
    %c0_71 = arith.constant 0 : index
    %c1_72 = arith.constant 1 : index
    %63 = vector.load %arg12[%c0_70, %c0_71, %c1_72] : memref<2x16x38xbf16, #tpu.memory_space<vmem>>, vector<2x16x32xbf16>
    %c0_73 = arith.constant 0 : index
    %c16_74 = arith.constant 16 : index
    %c0_75 = arith.constant 0 : index
    %64 = vector.load %arg13[%c0_73, %c16_74, %c0_75] : memref<2x112x32xbf16, #tpu.memory_space<vmem>>, vector<2x16x32xbf16>
    tpu.vector_store %arg13[%c0_73, %c16_74, %c0_75], %63 {strides = array<i32>} : memref<2x112x32xbf16, #tpu.memory_space<vmem>>, vector<2x16x32xbf16>,
    %c0_76 = arith.constant 0 : index
    %c0_77 = arith.constant 0 : index
    %c2_78 = arith.constant 2 : index
    %65 = vector.load %arg12[%c0_76, %c0_77, %c2_78] : memref<2x16x38xbf16, #tpu.memory_space<vmem>>, vector<2x16x32xbf16>
    %c0_79 = arith.constant 0 : index
    %c32_80 = arith.constant 32 : index
    %c0_81 = arith.constant 0 : index
    %66 = vector.load %arg13[%c0_79, %c32_80, %c0_81] : memref<2x112x32xbf16, #tpu.memory_space<vmem>>, vector<2x16x32xbf16>
    tpu.vector_store %arg13[%c0_79, %c32_80, %c0_81], %65 {strides = array<i32>} : memref<2x112x32xbf16, #tpu.memory_space<vmem>>, vector<2x16x32xbf16>,
    %c0_82 = arith.constant 0 : index
    %c0_83 = arith.constant 0 : index
    %c3_84 = arith.constant 3 : index
    %67 = vector.load %arg12[%c0_82, %c0_83, %c3_84] : memref<2x16x38xbf16, #tpu.memory_space<vmem>>, vector<2x16x32xbf16>
    %c0_85 = arith.constant 0 : index
    %c48_86 = arith.constant 48 : index
    %c0_87 = arith.constant 0 : index
    %68 = vector.load %arg13[%c0_85, %c48_86, %c0_87] : memref<2x112x32xbf16, #tpu.memory_space<vmem>>, vector<2x16x32xbf16>
    tpu.vector_store %arg13[%c0_85, %c48_86, %c0_87], %67 {strides = array<i32>} : memref<2x112x32xbf16, #tpu.memory_space<vmem>>, vector<2x16x32xbf16>,
    %c0_88 = arith.constant 0 : index
    %c0_89 = arith.constant 0 : index
    %c4_90 = arith.constant 4 : index
    %69 = vector.load %arg12[%c0_88, %c0_89, %c4_90] : memref<2x16x38xbf16, #tpu.memory_space<vmem>>, vector<2x16x32xbf16>
    %c0_91 = arith.constant 0 : index
    %c64_92 = arith.constant 64 : index
    %c0_93 = arith.constant 0 : index
    %70 = vector.load %arg13[%c0_91, %c64_92, %c0_93] : memref<2x112x32xbf16, #tpu.memory_space<vmem>>, vector<2x16x32xbf16>
    tpu.vector_store %arg13[%c0_91, %c64_92, %c0_93], %69 {strides = array<i32>} : memref<2x112x32xbf16, #tpu.memory_space<vmem>>, vector<2x16x32xbf16>,
    %c0_94 = arith.constant 0 : index
    %c0_95 = arith.constant 0 : index
    %c5_96 = arith.constant 5 : index
    %71 = vector.load %arg12[%c0_94, %c0_95, %c5_96] : memref<2x16x38xbf16, #tpu.memory_space<vmem>>, vector<2x16x32xbf16>
    %c0_97 = arith.constant 0 : index
    %c80_98 = arith.constant 80 : index
    %c0_99 = arith.constant 0 : index
    %72 = vector.load %arg13[%c0_97, %c80_98, %c0_99] : memref<2x112x32xbf16, #tpu.memory_space<vmem>>, vector<2x16x32xbf16>
    tpu.vector_store %arg13[%c0_97, %c80_98, %c0_99], %71 {strides = array<i32>} : memref<2x112x32xbf16, #tpu.memory_space<vmem>>, vector<2x16x32xbf16>,
    %c0_100 = arith.constant 0 : index
    %c0_101 = arith.constant 0 : index
    %c6_102 = arith.constant 6 : index
    %73 = vector.load %arg12[%c0_100, %c0_101, %c6_102] : memref<2x16x38xbf16, #tpu.memory_space<vmem>>, vector<2x16x32xbf16>
    %c0_103 = arith.constant 0 : index
    %c96_104 = arith.constant 96 : index
    %c0_105 = arith.constant 0 : index
    %74 = vector.load %arg13[%c0_103, %c96_104, %c0_105] : memref<2x112x32xbf16, #tpu.memory_space<vmem>>, vector<2x16x32xbf16>
    tpu.vector_store %arg13[%c0_103, %c96_104, %c0_105], %73 {strides = array<i32>} : memref<2x112x32xbf16, #tpu.memory_space<vmem>>, vector<2x16x32xbf16>,
    %c0_106 = arith.constant 0 : index
    %c0_107 = arith.constant 0 : index
    %75 = vector.load %arg4[%c0_106, %c0_107] : memref<16x112xbf16, #tpu.memory_space<vmem>>, vector<16x112xbf16>
    %c0_108 = arith.constant 0 : index
    %c0_109 = arith.constant 0 : index
    %c0_110 = arith.constant 0 : index
    %76 = vector.load %arg13[%c0_108, %c0_109, %c0_110] : memref<2x112x32xbf16, #tpu.memory_space<vmem>>, vector<1x112x32xbf16>
    %77 = vector.shape_cast %76 : vector<1x112x32xbf16> to vector<112x32xbf16>
    %cst_111 = arith.constant dense<0.000000e+00> : vector<16x32xf32>
    %78 = tpu.matmul %75, %77, %cst_111 {dimension_numbers = #tpu.dot_dimension_numbers<[1], [0], [0], [1], [0, 0, 1, 1], [], []>} : vector<16x112xbf16>, vector<112x32xbf16>, vector<16x32xf32> -> vector<16x32xf32>
    %c1_112 = arith.constant 1 : index
    %c0_113 = arith.constant 0 : index
    %c0_114 = arith.constant 0 : index
    %79 = vector.load %arg13[%c1_112, %c0_113, %c0_114] : memref<2x112x32xbf16, #tpu.memory_space<vmem>>, vector<1x112x32xbf16>
    %80 = vector.shape_cast %79 : vector<1x112x32xbf16> to vector<112x32xbf16>
    %cst_115 = arith.constant dense<0.000000e+00> : vector<16x32xf32>
    %81 = tpu.matmul %75, %80, %cst_115 {dimension_numbers = #tpu.dot_dimension_numbers<[1], [0], [0], [1], [0, 0, 1, 1], [], []>} : vector<16x112xbf16>, vector<112x32xbf16>, vector<16x32xf32> -> vector<16x32xf32>
    %82 = vector.shape_cast %78 : vector<16x32xf32> to vector<1x16x32xf32>
    %83 = vector.shape_cast %81 : vector<16x32xf32> to vector<1x16x32xf32>
    %84 = tpu.concatenate %82, %83 in 0 : vector<1x16x32xf32>, vector<1x16x32xf32> -> vector<2x16x32xf32>
    %cst_116 = arith.constant dense<0.000000e+00> : vector<16xf32>
    %85 = vector.multi_reduction <add>, %84, %cst_116 [0, 2] : vector<2x16x32xf32> to vector<16xf32>
    %86 = vector.shape_cast %85 : vector<16xf32> to vector<1x16x1xf32>
    %cst_117 = arith.constant 6.400000e+01 : f32
    %87 = vector.broadcast %cst_117 : f32 to vector<1x16x1xf32>
    %88 = arith.divf %86, %87 : vector<1x16x1xf32>
    %89 = vector.broadcast %88 : vector<1x16x1xf32> to vector<2x16x32xf32>
    %90 = arith.subf %84, %89 : vector<2x16x32xf32>
    %91 = arith.mulf %90, %90 : vector<2x16x32xf32>
    %cst_118 = arith.constant dense<0.000000e+00> : vector<16xf32>
    %92 = vector.multi_reduction <add>, %91, %cst_118 [0, 2] : vector<2x16x32xf32> to vector<16xf32>
    %93 = vector.shape_cast %92 : vector<16xf32> to vector<1x16x1xf32>
    %cst_119 = arith.constant 6.400000e+01 : f32
    %94 = vector.broadcast %cst_119 : f32 to vector<1x16x1xf32>
    %95 = arith.divf %93, %94 : vector<1x16x1xf32>
    %96 = vector.broadcast %88 : vector<1x16x1xf32> to vector<2x16x32xf32>
    %97 = arith.subf %84, %96 : vector<2x16x32xf32>
    %cst_120 = arith.constant 9.99999974E-6 : f32
    %98 = vector.broadcast %cst_120 : f32 to vector<1x16x1xf32>
    %99 = arith.addf %95, %98 : vector<1x16x1xf32>
    %100 = math.rsqrt %99 : vector<1x16x1xf32>
    %101 = vector.broadcast %100 : vector<1x16x1xf32> to vector<2x16x32xf32>
    %102 = arith.mulf %97, %101 : vector<2x16x32xf32>
    %c0_121 = arith.constant 0 : index
    %c0_122 = arith.constant 0 : index
    %103 = vector.load %arg5[%c0_121, %c0_122] : memref<16x1xf32, #tpu.memory_space<vmem>>, vector<16x1xf32>
    %104 = vector.shape_cast %103 : vector<16x1xf32> to vector<1x16x1xf32>
    %105 = vector.broadcast %104 : vector<1x16x1xf32> to vector<2x16x32xf32>
    %106 = arith.mulf %102, %105 : vector<2x16x32xf32>
    %c0_123 = arith.constant 0 : index
    %c0_124 = arith.constant 0 : index
    %107 = vector.load %arg6[%c0_123, %c0_124] : memref<16x1xf32, #tpu.memory_space<vmem>>, vector<16x1xf32>
    %108 = vector.shape_cast %107 : vector<16x1xf32> to vector<1x16x1xf32>
    %109 = vector.broadcast %108 : vector<1x16x1xf32> to vector<2x16x32xf32>
    %110 = arith.addf %106, %109 : vector<2x16x32xf32>
    %cst_125 = arith.constant 0.000000e+00 : f32
    %111 = vector.broadcast %cst_125 : f32 to vector<2x16x32xf32>
    %112 = arith.maximumf %110, %111 : vector<2x16x32xf32>
    %113 = vector.extract_strided_slice %112 {offsets = [0, 0, 0], sizes = [1, 16, 32], strides = [1, 1, 1]} : vector<2x16x32xf32> to vector<1x16x32xf32>
    %114 = vector.shape_cast %113 : vector<1x16x32xf32> to vector<16x32xf32>
    %c0_126 = arith.constant 0 : index
    %c0_127 = arith.constant 0 : index
    %115 = vector.load %arg7[%c0_126, %c0_127] : memref<2x16xf32, #tpu.memory_space<vmem>>, vector<2x16xf32>
    %c0_128 = arith.constant 0 : index
    %c0_129 = arith.constant 0 : index
    %116 = vector.load %arg8[%c0_128, %c0_129] : memref<2x1xf32, #tpu.memory_space<vmem>>, vector<2x1xf32>
    %c0_130 = arith.constant 0 : index
    %c0_131 = arith.constant 0 : index
    %117 = vector.load %arg9[%c0_130, %c0_131] : memref<16x2xf32, #tpu.memory_space<vmem>>, vector<16x2xf32>
    %c0_132 = arith.constant 0 : index
    %c0_133 = arith.constant 0 : index
    %118 = vector.load %arg10[%c0_132, %c0_133] : memref<16x1xf32, #tpu.memory_space<vmem>>, vector<16x1xf32>
    %cst_134 = arith.constant dense<0.000000e+00> : vector<16xf32>
    %119 = vector.multi_reduction <add>, %114, %cst_134 [1] : vector<16x32xf32> to vector<16xf32>
    %120 = vector.shape_cast %119 : vector<16xf32> to vector<16x1xf32>
    %cst_135 = arith.constant 3.200000e+01 : f32
    %121 = vector.broadcast %cst_135 : f32 to vector<16x1xf32>
    %122 = arith.divf %120, %121 : vector<16x1xf32>
    %cst_136 = arith.constant dense<0.000000e+00> : vector<2x1xf32>
    %123 = tpu.matmul %115, %122, %cst_136 {dimension_numbers = #tpu.dot_dimension_numbers<[1], [0], [0], [1], [0, 0, 1, 1], [], []>} : vector<2x16xf32>, vector<16x1xf32>, vector<2x1xf32> -> vector<2x1xf32>
    %124 = arith.addf %123, %116 : vector<2x1xf32>
    %cst_137 = arith.constant 0.000000e+00 : f32
    %125 = vector.broadcast %cst_137 : f32 to vector<2x1xf32>
    %126 = arith.maximumf %124, %125 : vector<2x1xf32>
    %cst_138 = arith.constant dense<0.000000e+00> : vector<16x1xf32>
    %127 = tpu.matmul %117, %126, %cst_138 {dimension_numbers = #tpu.dot_dimension_numbers<[1], [0], [0], [1], [0, 0, 1, 1], [], []>} : vector<16x2xf32>, vector<2x1xf32>, vector<16x1xf32> -> vector<16x1xf32>
    %128 = arith.addf %127, %118 : vector<16x1xf32>
    %129 = arith.negf %128 : vector<16x1xf32>
    %130 = math.exp %129 : vector<16x1xf32>
    %cst_139 = arith.constant 1.000000e+00 : f32
    %131 = vector.broadcast %cst_139 : f32 to vector<16x1xf32>
    %132 = arith.addf %131, %130 : vector<16x1xf32>
    %133 = arith.divf %131, %132 : vector<16x1xf32>
    %134 = vector.extract_strided_slice %112 {offsets = [1, 0, 0], sizes = [1, 16, 32], strides = [1, 1, 1]} : vector<2x16x32xf32> to vector<1x16x32xf32>
    %135 = vector.shape_cast %134 : vector<1x16x32xf32> to vector<16x32xf32>
    %c0_140 = arith.constant 0 : index
    %c0_141 = arith.constant 0 : index
    %136 = vector.load %arg7[%c0_140, %c0_141] : memref<2x16xf32, #tpu.memory_space<vmem>>, vector<2x16xf32>
    %c0_142 = arith.constant 0 : index
    %c0_143 = arith.constant 0 : index
    %137 = vector.load %arg8[%c0_142, %c0_143] : memref<2x1xf32, #tpu.memory_space<vmem>>, vector<2x1xf32>
    %c0_144 = arith.constant 0 : index
    %c0_145 = arith.constant 0 : index
    %138 = vector.load %arg9[%c0_144, %c0_145] : memref<16x2xf32, #tpu.memory_space<vmem>>, vector<16x2xf32>
    %c0_146 = arith.constant 0 : index
    %c0_147 = arith.constant 0 : index
    %139 = vector.load %arg10[%c0_146, %c0_147] : memref<16x1xf32, #tpu.memory_space<vmem>>, vector<16x1xf32>
    %cst_148 = arith.constant dense<0.000000e+00> : vector<16xf32>
    %140 = vector.multi_reduction <add>, %135, %cst_148 [1] : vector<16x32xf32> to vector<16xf32>
    %141 = vector.shape_cast %140 : vector<16xf32> to vector<16x1xf32>
    %cst_149 = arith.constant 3.200000e+01 : f32
    %142 = vector.broadcast %cst_149 : f32 to vector<16x1xf32>
    %143 = arith.divf %141, %142 : vector<16x1xf32>
    %cst_150 = arith.constant dense<0.000000e+00> : vector<2x1xf32>
    %144 = tpu.matmul %136, %143, %cst_150 {dimension_numbers = #tpu.dot_dimension_numbers<[1], [0], [0], [1], [0, 0, 1, 1], [], []>} : vector<2x16xf32>, vector<16x1xf32>, vector<2x1xf32> -> vector<2x1xf32>
    %145 = arith.addf %144, %137 : vector<2x1xf32>
    %cst_151 = arith.constant 0.000000e+00 : f32
    %146 = vector.broadcast %cst_151 : f32 to vector<2x1xf32>
    %147 = arith.maximumf %145, %146 : vector<2x1xf32>
    %cst_152 = arith.constant dense<0.000000e+00> : vector<16x1xf32>
    %148 = tpu.matmul %138, %147, %cst_152 {dimension_numbers = #tpu.dot_dimension_numbers<[1], [0], [0], [1], [0, 0, 1, 1], [], []>} : vector<16x2xf32>, vector<2x1xf32>, vector<16x1xf32> -> vector<16x1xf32>
    %149 = arith.addf %148, %139 : vector<16x1xf32>
    %150 = arith.negf %149 : vector<16x1xf32>
    %151 = math.exp %150 : vector<16x1xf32>
    %cst_153 = arith.constant 1.000000e+00 : f32
    %152 = vector.broadcast %cst_153 : f32 to vector<16x1xf32>
    %153 = arith.addf %152, %151 : vector<16x1xf32>
    %154 = arith.divf %152, %153 : vector<16x1xf32>
    %155 = vector.shape_cast %133 : vector<16x1xf32> to vector<1x16x1xf32>
    %156 = vector.shape_cast %154 : vector<16x1xf32> to vector<1x16x1xf32>
    %157 = tpu.concatenate %155, %156 in 0 : vector<1x16x1xf32>, vector<1x16x1xf32> -> vector<2x16x1xf32>
    %c0_154 = arith.constant 0 : index
    %c0_155 = arith.constant 0 : index
    %c0_156 = arith.constant 0 : index
    %158 = vector.load %arg0[%c0_154, %c0_155, %c0_156] : memref<2x16x32xf32, #tpu.memory_space<vmem>>, vector<2x16x32xf32>
    %159 = arith.addf %158, %112 : vector<2x16x32xf32>
    %160 = vector.broadcast %157 : vector<2x16x1xf32> to vector<2x16x32xf32>
    %161 = arith.addf %159, %160 : vector<2x16x32xf32>
    %c0_157 = arith.constant 0 : index
    %c0_158 = arith.constant 0 : index
    %c0_159 = arith.constant 0 : index
    %162 = vector.load %arg11[%c0_157, %c0_158, %c0_159] : memref<2x16x32xf32, #tpu.memory_space<vmem>>, vector<2x16x32xf32>
    tpu.vector_store %arg11[%c0_157, %c0_158, %c0_159], %161 {strides = array<i32>} : memref<2x16x32xf32, #tpu.memory_space<vmem>>, vector<2x16x32xf32>,
    return
  }
}

</mosaic_0001>

<llo_original>
// kernel: re_block_forward.1
$region0: #{re_block_forward.1}
  #allocation0 [shape = 'u32[]', space=smem, size = 0x4, offset = 0x4, fixed_abs, tag = 'smem constant byte address 0x4 - core index']
  #allocation1 [shape = 'u32[144,128]{1,0:T(1,128)}', space=vmem, size = 0x12000, scoped, tag = 'internal scratch']
  #allocation2 [shape = 'bf16[2,16,38]{2,1,0:T(16,128)(2,1)}', space=vmem, size = 0x2000, scoped, tag = 'scratch operand']
  #allocation3 [shape = 'bf16[2,112,32]{2,1,0:T(16,128)(2,1)}', space=vmem, size = 0xe000, scoped, tag = 'scratch operand']
  %s0 = inlined_call_operand.vmem [shape: f32[2,16,32], index: 0, kind: input, shape index: {}]
  %s1 = inlined_call_operand.vmem [shape: bf16[16,112], index: 1, kind: input, shape index: {}]
  %s2 = inlined_call_operand.vmem [shape: f32[16,1], index: 2, kind: input, shape index: {}]
  %s3 = inlined_call_operand.vmem [shape: f32[16,1], index: 3, kind: input, shape index: {}]
  %s4 = inlined_call_operand.vmem [shape: bf16[16,112], index: 4, kind: input, shape index: {}]
  %s5 = inlined_call_operand.vmem [shape: f32[16,1], index: 5, kind: input, shape index: {}]
  %s6 = inlined_call_operand.vmem [shape: f32[16,1], index: 6, kind: input, shape index: {}]
  %s7 = inlined_call_operand.vmem [shape: f32[2,16], index: 7, kind: input, shape index: {}]
  %s8 = inlined_call_operand.vmem [shape: f32[2,1], index: 8, kind: input, shape index: {}]
  %s9 = inlined_call_operand.vmem [shape: f32[16,2], index: 9, kind: input, shape index: {}]
  %s10 = inlined_call_operand.vmem [shape: f32[16,1], index: 10, kind: input, shape index: {}]
  %s11 = inlined_call_operand.hbm [shape: f32[2,16,32], index: 11, kind: output, shape index: {}]
  %s12 = sld [smem:[#allocation0]]
  $region54: #{re_block_forward.1} parent=0
    _
  %s14 = ssub.s32 1, %s12
  %s15 = scalar_select 0, %s14, %s12
  $region1: #{re_block_forward.1} parent=0
    #allocation4 [shape = 'u8[16384]{0}', space=vmem, size = 0x4000, scoped, tag = 'output window, operand 0, single buffered']
    #allocation5 [shape = 's32[1]{0}', space=sflag, size = 0x4, scoped, tag = 'scoped memory for re_block_forward.1']
    %16 = vsyncpa [#allocation5], 0
    // Predicated region
    $region2: #{re_block_forward.1} parent=1 // pred_check
      _
    $region3: #{re_block_forward.1} parent=1 // pred_check_branch
      %18 = sbr.rel (0) target = $region5
    $region4: #{re_block_forward.1} parent=1 // pred_region
      _
    $region5: #{re_block_forward.1} parent=1 // pred_fallthru
      _
    // Predicated region
    $region6: #{re_block_forward.1} parent=1 // pred_check
      _
    $region7: #{re_block_forward.1} parent=1 // pred_check_branch
      %20 = sbr.rel (0) target = $region9
    $region8: #{re_block_forward.1} parent=1 // pred_region
      _
    $region9: #{re_block_forward.1} parent=1 // pred_fallthru
      _
    // Predicated region
    $region10: #{re_block_forward.1} parent=1 // pred_check
      _
    $region11: #{re_block_forward.1} parent=1 // pred_check_branch
      %22 = sbr.rel (0) target = $region13
    $region12: #{re_block_forward.1} parent=1 // pred_region
      _
    $region13: #{re_block_forward.1} parent=1 // pred_fallthru
      _
    // Predicated region
    $region14: #{re_block_forward.1} parent=1 // pred_check
      _
    $region15: #{re_block_forward.1} parent=1 // pred_check_branch
      %24 = sbr.rel (0) target = $region17
    $region16: #{re_block_forward.1} parent=1 // pred_region
      _
    $region17: #{re_block_forward.1} parent=1 // pred_fallthru
      _
    // Predicated region
    $region18: #{re_block_forward.1} parent=1 // pred_check
      _
    $region19: #{re_block_forward.1} parent=1 // pred_check_branch
      %26 = sbr.rel (0) target = $region21
    $region20: #{re_block_forward.1} parent=1 // pred_region
      _
    $region21: #{re_block_forward.1} parent=1 // pred_fallthru
      _
    // Predicated region
    $region22: #{re_block_forward.1} parent=1 // pred_check
      _
    $region23: #{re_block_forward.1} parent=1 // pred_check_branch
      %28 = sbr.rel (0) target = $region25
    $region24: #{re_block_forward.1} parent=1 // pred_region
      _
    $region25: #{re_block_forward.1} parent=1 // pred_fallthru
      _
    // Predicated region
    $region26: #{re_block_forward.1} parent=1 // pred_check
      _
    $region27: #{re_block_forward.1} parent=1 // pred_check_branch
      %30 = sbr.rel (0) target = $region29
    $region28: #{re_block_forward.1} parent=1 // pred_region
      _
    $region29: #{re_block_forward.1} parent=1 // pred_fallthru
      _
    // Predicated region
    $region30: #{re_block_forward.1} parent=1 // pred_check
      _
    $region31: #{re_block_forward.1} parent=1 // pred_check_branch
      %32 = sbr.rel (0) target = $region33
    $region32: #{re_block_forward.1} parent=1 // pred_region
      _
    $region33: #{re_block_forward.1} parent=1 // pred_fallthru
      _
    // Predicated region
    $region34: #{re_block_forward.1} parent=1 // pred_check
      _
    $region35: #{re_block_forward.1} parent=1 // pred_check_branch
      %34 = sbr.rel (0) target = $region37
    $region36: #{re_block_forward.1} parent=1 // pred_region
      _
    $region37: #{re_block_forward.1} parent=1 // pred_fallthru
      _
    // Predicated region
    $region38: #{re_block_forward.1} parent=1 // pred_check
      _
    $region39: #{re_block_forward.1} parent=1 // pred_check_branch
      %36 = sbr.rel (0) target = $region41
    $region40: #{re_block_forward.1} parent=1 // pred_region
      _
    $region41: #{re_block_forward.1} parent=1 // pred_fallthru
      _
    // Predicated region
    $region42: #{re_block_forward.1} parent=1 // pred_check
      _
    $region43: #{re_block_forward.1} parent=1 // pred_check_branch
      %38 = sbr.rel (0) target = $region45
    $region44: #{re_block_forward.1} parent=1 // pred_region
      _
    $region45: #{re_block_forward.1} parent=1 // pred_fallthru
      _
    %vm40 = vcmask 23552
    %41 = vst.msk [vmem:[#allocation2] sm:$0xff] %vm40, 0
    %42 = vst.msk [vmem:[#allocation2 + $0x8] sm:$0xff] %vm40, 0
    %vm43 = vcmask 310552
    %44 = vst.msk [vmem:[#allocation2] sm:$0xff] %vm43, 0
    %45 = vst.msk [vmem:[#allocation2 + $0x8] sm:$0xff] %vm43, 0
    %v46 = vld [vmem:[%s0] sm:$0xff]
    %v47 = vld [vmem:[%s0 + $0x8] sm:$0xff]
    %v48 = vld [vmem:[%s0 + $0x10] sm:$0xff]
    %v49 = vld [vmem:[%s0 + $0x18] sm:$0xff]
    %v50 = vpack.c.bf16 %v47, %v46
    %v51 = vpack.c.bf16 %v49, %v48
    %54 = vrot.lane.b32.xlu0 %v50, 3
    %v55 = vpop.permute.xlu0 %54
    %56 = vrot.lane.b32.xlu0 %v51, 3
    %v57 = vpop.permute.xlu0 %56
    %vm60 = vcmask 285720
    %61 = vst.msk [vmem:[#allocation2] sm:$0xff] %vm60, %v55
    %62 = vst.msk [vmem:[#allocation2 + $0x8] sm:$0xff] %vm60, %v57
    %v63 = vld [vmem:[#allocation2] sm:$0xff]
    %v64 = vld [vmem:[#allocation2 + $0x8] sm:$0xff]
    %vm65 = vcmask 261120
    %66 = vst.msk [vmem:[#allocation3] sm:$0xff] %vm65, %v63
    %67 = vst.msk [vmem:[#allocation3 + $0x38] sm:$0xff] %vm65, %v64
    %v68 = vld [vmem:[#allocation2] sm:$0xff]
    %v69 = vld [vmem:[#allocation2 + $0x8] sm:$0xff]
    %72 = vrot.lane.b32.xlu0 %v68, 127
    %v73 = vpop.permute.xlu0 %72
    %74 = vrot.lane.b32.xlu0 %v69, 127
    %v75 = vpop.permute.xlu0 %74
    %78 = vst.msk [vmem:[#allocation3 + $0x8] sm:$0xff] %vm65, %v73
    %79 = vst.msk [vmem:[#allocation3 + $0x40] sm:$0xff] %vm65, %v75
    %v80 = vld [vmem:[#allocation2] sm:$0xff]
    %v81 = vld [vmem:[#allocation2 + $0x8] sm:$0xff]
    %84 = vrot.lane.b32.xlu0 %v80, 126
    %v85 = vpop.permute.xlu0 %84
    %86 = vrot.lane.b32.xlu0 %v81, 126
    %v87 = vpop.permute.xlu0 %86
    %90 = vst.msk [vmem:[#allocation3 + $0x10] sm:$0xff] %vm65, %v85
    %91 = vst.msk [vmem:[#allocation3 + $0x48] sm:$0xff] %vm65, %v87
    %v92 = vld [vmem:[#allocation2] sm:$0xff]
    %v93 = vld [vmem:[#allocation2 + $0x8] sm:$0xff]
    %96 = vrot.lane.b32.xlu0 %v92, 125
    %v97 = vpop.permute.xlu0 %96
    %98 = vrot.lane.b32.xlu0 %v93, 125
    %v99 = vpop.permute.xlu0 %98
    %102 = vst.msk [vmem:[#allocation3 + $0x18] sm:$0xff] %vm65, %v97
    %103 = vst.msk [vmem:[#allocation3 + $0x50] sm:$0xff] %vm65, %v99
    %v104 = vld [vmem:[#allocation2] sm:$0xff]
    %v105 = vld [vmem:[#allocation2 + $0x8] sm:$0xff]
    %108 = vrot.lane.b32.xlu0 %v104, 124
    %v109 = vpop.permute.xlu0 %108
    %110 = vrot.lane.b32.xlu0 %v105, 124
    %v111 = vpop.permute.xlu0 %110
    %114 = vst.msk [vmem:[#allocation3 + $0x20] sm:$0xff] %vm65, %v109
    %115 = vst.msk [vmem:[#allocation3 + $0x58] sm:$0xff] %vm65, %v111
    %v116 = vld [vmem:[#allocation2] sm:$0xff]
    %v117 = vld [vmem:[#allocation2 + $0x8] sm:$0xff]
    %120 = vrot.lane.b32.xlu0 %v116, 123
    %v121 = vpop.permute.xlu0 %120
    %122 = vrot.lane.b32.xlu0 %v117, 123
    %v123 = vpop.permute.xlu0 %122
    %126 = vst.msk [vmem:[#allocation3 + $0x28] sm:$0xff] %vm65, %v121
    %127 = vst.msk [vmem:[#allocation3 + $0x60] sm:$0xff] %vm65, %v123
    %v128 = vld [vmem:[#allocation2] sm:$0xff]
    %v129 = vld [vmem:[#allocation2 + $0x8] sm:$0xff]
    %132 = vrot.lane.b32.xlu0 %v128, 122
    %v133 = vpop.permute.xlu0 %132
    %134 = vrot.lane.b32.xlu0 %v129, 122
    %v135 = vpop.permute.xlu0 %134
    %138 = vst.msk [vmem:[#allocation3 + $0x30] sm:$0xff] %vm65, %v133
    %139 = vst.msk [vmem:[#allocation3 + $0x68] sm:$0xff] %vm65, %v135
    %v140 = vld [vmem:[%s1] sm:$0xf]
    %v141 = vld [vmem:[%s1 + $0x4] sm:$0xf]
    %v142 = vld [vmem:[#allocation3] sm:$0xff]
    %v143 = vld [vmem:[#allocation3 + $0x8] sm:$0xff]
    %v144 = vld [vmem:[#allocation3 + $0x10] sm:$0xff]
    %v145 = vld [vmem:[#allocation3 + $0x18] sm:$0xff]
    %v146 = vld [vmem:[#allocation3 + $0x20] sm:$0xff]
    %v147 = vld [vmem:[#allocation3 + $0x28] sm:$0xff]
    %v148 = vld [vmem:[#allocation3 + $0x30] sm:$0xff]
    %v151 = vunpack.c.l.b16 %v140
    %v152 = vunpack.c.l.b16 %v141
    %v153 = vpack.c.b16 %v152, %v151
    %vm154 = vcmask 916480
    %v156 = vsel %vm154, %v153, 0
    %158 = vmatprep.subr.bf16.mxu0 0
    %159 = vmatpush1.bf16.msra.mxu0 %v142
    %160 = vmatprep.subr.bf16.mxu0 0
    %161 = vmatpush1.bf16.msra.mxu0 %v143
    %162 = vmatprep.subr.bf16.mxu0 0
    %163 = vmatpush1.bf16.msra.mxu0 %v144
    %164 = vmatprep.subr.bf16.mxu0 0
    %165 = vmatpush1.bf16.msra.mxu0 %v145
    %166 = vmatprep.subr.bf16.mxu0 0
    %167 = vmatpush1.bf16.msra.mxu0 %v146
    %168 = vmatprep.subr.bf16.mxu0 0
    %169 = vmatpush1.bf16.msra.mxu0 %v147
    %170 = vmatprep.subr.bf16.mxu0 0
    %171 = vmatpush1.bf16.msra.mxu0 %v148
    %172 = vmatprep.subr.bf16.mxu0 0
    %173 = vmatpush1.bf16.msra.mxu0 0
    %174 = vmatprep.subr.bf16.mxu0 0
    %175 = vmatpush1.bf16.msra.mxu0 0
    %176 = vmatprep.subr.bf16.mxu0 0
    %177 = vmatpush1.bf16.msra.mxu0 0
    %178 = vmatprep.subr.bf16.mxu0 0
    %179 = vmatpush1.bf16.msra.mxu0 0
    %180 = vmatprep.subr.bf16.mxu0 0
    %181 = vmatpush1.bf16.msra.mxu0 0
    %182 = vmatprep.subr.bf16.mxu0 0
    %183 = vmatpush1.bf16.msra.mxu0 0
    %184 = vmatprep.subr.bf16.mxu0 0
    %185 = vmatpush1.bf16.msra.mxu0 0
    %186 = vmatprep.subr.bf16.mxu0 0
    %187 = vmatpush1.bf16.msra.mxu0 0
    %188 = vmatprep.subr.bf16.mxu0 0
    %189 = vmatpush1.bf16.msra.mxu0 0
    %190 = vmatprep.mubr.bf16.mxu0 0
    %191 = vmatmul.mubr.bf16.gmra.mrb[0].mxu0 %v156
    %v192 = vpop.f32.mrb[0].mxu0
    %v193 = vadd.f32 0.0, %v192
    %v194 = vpop.f32.mrb[0].mxu0
    %v195 = vpop.f32.mrb[0].mxu0
    %v196 = vadd.f32 0.0, %v195
    %v197 = vpop.f32.mrb[0].mxu0
    %198 = vdwg.mxu0
    %s199 = scalar_lea.vmem [#allocation3], 56
    %v200 = vld [vmem:[%s199] sm:$0xff]
    %v201 = vld [vmem:[%s199 + $0x8] sm:$0xff]
    %v202 = vld [vmem:[%s199 + $0x10] sm:$0xff]
    %v203 = vld [vmem:[%s199 + $0x18] sm:$0xff]
    %v204 = vld [vmem:[%s199 + $0x20] sm:$0xff]
    %v205 = vld [vmem:[%s199 + $0x28] sm:$0xff]
    %v206 = vld [vmem:[%s199 + $0x30] sm:$0xff]
    %207 = vmatprep.subr.bf16.mxu0 0
    %208 = vmatpush1.bf16.msra.mxu0 %v200
    %209 = vmatprep.subr.bf16.mxu0 0
    %210 = vmatpush1.bf16.msra.mxu0 %v201
    %211 = vmatprep.subr.bf16.mxu0 0
    %212 = vmatpush1.bf16.msra.mxu0 %v202
    %213 = vmatprep.subr.bf16.mxu0 0
    %214 = vmatpush1.bf16.msra.mxu0 %v203
    %215 = vmatprep.subr.bf16.mxu0 0
    %216 = vmatpush1.bf16.msra.mxu0 %v204
    %217 = vmatprep.subr.bf16.mxu0 0
    %218 = vmatpush1.bf16.msra.mxu0 %v205
    %219 = vmatprep.subr.bf16.mxu0 0
    %220 = vmatpush1.bf16.msra.mxu0 %v206
    %221 = vmatprep.subr.bf16.mxu0 0
    %222 = vmatpush1.bf16.msra.mxu0 0
    %223 = vmatprep.subr.bf16.mxu0 0
    %224 = vmatpush1.bf16.msra.mxu0 0
    %225 = vmatprep.subr.bf16.mxu0 0
    %226 = vmatpush1.bf16.msra.mxu0 0
    %227 = vmatprep.subr.bf16.mxu0 0
    %228 = vmatpush1.bf16.msra.mxu0 0
    %229 = vmatprep.subr.bf16.mxu0 0
    %230 = vmatpush1.bf16.msra.mxu0 0
    %231 = vmatprep.subr.bf16.mxu0 0
    %232 = vmatpush1.bf16.msra.mxu0 0
    %233 = vmatprep.subr.bf16.mxu0 0
    %234 = vmatpush1.bf16.msra.mxu0 0
    %235 = vmatprep.subr.bf16.mxu0 0
    %236 = vmatpush1.bf16.msra.mxu0 0
    %237 = vmatprep.subr.bf16.mxu0 0
    %238 = vmatpush1.bf16.msra.mxu0 0
    %239 = vmatprep.mubr.bf16.mxu0 0
    %240 = vmatmul.mubr.bf16.gmra.mrb[0].mxu0 %v156
    %v241 = vpop.f32.mrb[0].mxu0
    %v242 = vadd.f32 0.0, %v241
    %v243 = vpop.f32.mrb[0].mxu0
    %v244 = vpop.f32.mrb[0].mxu0
    %v245 = vadd.f32 0.0, %v244
    %v246 = vpop.f32.mrb[0].mxu0
    %247 = vdwg.mxu0
    %v248 = vsel %vm65, %v193, 0.0
    %v249 = vsel %vm65, %v242, 0.0
    %v250 = vadd.f32 %v248, %v249
    %251 = vadd.xlane.f32.xlu0 %v250
    %v252 = vpop.xlane.xlu0 %251
    %v253 = vsel %vm65, %v196, 0.0
    %v254 = vsel %vm65, %v245, 0.0
    %v255 = vadd.f32 %v253, %v254
    %256 = vadd.xlane.f32.xlu0 %v255
    %v257 = vpop.xlane.xlu0 %256
    %v258 = vrcp.pop 64.0
    %v259 = vmul.f32 %v252, %v258
    %v260 = vmul.f32 %v257, %v258
    %v261 = vsub.f32 %v193, %v259
    %v262 = vsub.f32 %v196, %v260
    %v263 = vsub.f32 %v242, %v259
    %v264 = vsub.f32 %v245, %v260
    %v265 = vmul.f32 %v261, %v261
    %v266 = vmul.f32 %v262, %v262
    %v267 = vmul.f32 %v263, %v263
    %v268 = vmul.f32 %v264, %v264
    %v269 = vsel %vm65, %v265, 0.0
    %v270 = vsel %vm65, %v267, 0.0
    %v271 = vadd.f32 %v269, %v270
    %272 = vadd.xlane.f32.xlu0 %v271
    %v273 = vpop.xlane.xlu0 %272
    %v274 = vsel %vm65, %v266, 0.0
    %v275 = vsel %vm65, %v268, 0.0
    %v276 = vadd.f32 %v274, %v275
    %277 = vadd.xlane.f32.xlu0 %v276
    %v278 = vpop.xlane.xlu0 %277
    %v279 = vmul.f32 %v273, %v258
    %v280 = vmul.f32 %v278, %v258
    %v281 = vadd.f32 %v279, 1e-05
    %v282 = vadd.f32 %v280, 1e-05
    %v283 = vrsqrt.pop %v281
    %v284 = vrsqrt.pop %v282
    %v285 = vmul.f32 %v261, %v283
    %v286 = vmul.f32 %v262, %v284
    %v287 = vmul.f32 %v263, %v283
    %v288 = vmul.f32 %v264, %v284
    %v289 = vld [vmem:[%s2] sm:$0xff]
    %v290 = vld [vmem:[%s2 + $0x8] sm:$0xff]
    %292 = vset.pattern.permute.xlu0 0
    %293 = vperm.xlu0 %292, %v289
    %v294 = vpop.permute.xlu0 %293
    %297 = vset.pattern.permute.xlu0 0
    %298 = vperm.xlu0 %297, %v290
    %v299 = vpop.permute.xlu0 %298
    %v301 = vmul.f32 %v285, %v294
    %v302 = vmul.f32 %v286, %v299
    %v303 = vmul.f32 %v287, %v294
    %v304 = vmul.f32 %v288, %v299
    %v305 = vld [vmem:[%s3] sm:$0xff]
    %v306 = vld [vmem:[%s3 + $0x8] sm:$0xff]
    %308 = vset.pattern.permute.xlu0 0
    %309 = vperm.xlu0 %308, %v305
    %v310 = vpop.permute.xlu0 %309
    %313 = vset.pattern.permute.xlu0 0
    %314 = vperm.xlu0 %313, %v306
    %v315 = vpop.permute.xlu0 %314
    %v317 = vadd.f32 %v301, %v310
    %v318 = vadd.f32 %v302, %v315
    %v319 = vadd.f32 %v303, %v310
    %v320 = vadd.f32 %v304, %v315
    %v321 = vmax.f32 %v317, 0.0
    %v322 = vmax.f32 %v318, 0.0
    %v323 = vmax.f32 %v319, 0.0
    %v324 = vmax.f32 %v320, 0.0
    %v325 = vpack.c.bf16 %v322, %v321
    %v326 = vpack.c.bf16 %v324, %v323
    %329 = vrot.lane.b32.xlu0 %v325, 3
    %v330 = vpop.permute.xlu0 %329
    %331 = vrot.lane.b32.xlu0 %v326, 3
    %v332 = vpop.permute.xlu0 %331
    %335 = vst.msk [vmem:[#allocation2] sm:$0xff] %vm60, %v330
    %336 = vst.msk [vmem:[#allocation2 + $0x8] sm:$0xff] %vm60, %v332
    %v337 = vld [vmem:[#allocation2] sm:$0xff]
    %v338 = vld [vmem:[#allocation2 + $0x8] sm:$0xff]
    %339 = vst.msk [vmem:[#allocation3] sm:$0xff] %vm65, %v337
    %340 = vst.msk [vmem:[#allocation3 + $0x38] sm:$0xff] %vm65, %v338
    %v341 = vld [vmem:[#allocation2] sm:$0xff]
    %v342 = vld [vmem:[#allocation2 + $0x8] sm:$0xff]
    %345 = vrot.lane.b32.xlu0 %v341, 127
    %v346 = vpop.permute.xlu0 %345
    %347 = vrot.lane.b32.xlu0 %v342, 127
    %v348 = vpop.permute.xlu0 %347
    %351 = vst.msk [vmem:[#allocation3 + $0x8] sm:$0xff] %vm65, %v346
    %352 = vst.msk [vmem:[#allocation3 + $0x40] sm:$0xff] %vm65, %v348
    %v353 = vld [vmem:[#allocation2] sm:$0xff]
    %v354 = vld [vmem:[#allocation2 + $0x8] sm:$0xff]
    %357 = vrot.lane.b32.xlu0 %v353, 126
    %v358 = vpop.permute.xlu0 %357
    %359 = vrot.lane.b32.xlu0 %v354, 126
    %v360 = vpop.permute.xlu0 %359
    %363 = vst.msk [vmem:[#allocation3 + $0x10] sm:$0xff] %vm65, %v358
    %364 = vst.msk [vmem:[#allocation3 + $0x48] sm:$0xff] %vm65, %v360
    %v365 = vld [vmem:[#allocation2] sm:$0xff]
    %v366 = vld [vmem:[#allocation2 + $0x8] sm:$0xff]
    %369 = vrot.lane.b32.xlu0 %v365, 125
    %v370 = vpop.permute.xlu0 %369
    %371 = vrot.lane.b32.xlu0 %v366, 125
    %v372 = vpop.permute.xlu0 %371
    %375 = vst.msk [vmem:[#allocation3 + $0x18] sm:$0xff] %vm65, %v370
    %376 = vst.msk [vmem:[#allocation3 + $0x50] sm:$0xff] %vm65, %v372
    %v377 = vld [vmem:[#allocation2] sm:$0xff]
    %v378 = vld [vmem:[#allocation2 + $0x8] sm:$0xff]
    %381 = vrot.lane.b32.xlu0 %v377, 124
    %v382 = vpop.permute.xlu0 %381
    %383 = vrot.lane.b32.xlu0 %v378, 124
    %v384 = vpop.permute.xlu0 %383
    %387 = vst.msk [vmem:[#allocation3 + $0x20] sm:$0xff] %vm65, %v382
    %388 = vst.msk [vmem:[#allocation3 + $0x58] sm:$0xff] %vm65, %v384
    %v389 = vld [vmem:[#allocation2] sm:$0xff]
    %v390 = vld [vmem:[#allocation2 + $0x8] sm:$0xff]
    %393 = vrot.lane.b32.xlu0 %v389, 123
    %v394 = vpop.permute.xlu0 %393
    %395 = vrot.lane.b32.xlu0 %v390, 123
    %v396 = vpop.permute.xlu0 %395
    %399 = vst.msk [vmem:[#allocation3 + $0x28] sm:$0xff] %vm65, %v394
    %400 = vst.msk [vmem:[#allocation3 + $0x60] sm:$0xff] %vm65, %v396
    %v401 = vld [vmem:[#allocation2] sm:$0xff]
    %v402 = vld [vmem:[#allocation2 + $0x8] sm:$0xff]
    %405 = vrot.lane.b32.xlu0 %v401, 122
    %v406 = vpop.permute.xlu0 %405
    %407 = vrot.lane.b32.xlu0 %v402, 122
    %v408 = vpop.permute.xlu0 %407
    %411 = vst.msk [vmem:[#allocation3 + $0x30] sm:$0xff] %vm65, %v406
    %412 = vst.msk [vmem:[#allocation3 + $0x68] sm:$0xff] %vm65, %v408
    %v413 = vld [vmem:[%s4] sm:$0xf]
    %v414 = vld [vmem:[%s4 + $0x4] sm:$0xf]
    %v415 = vld [vmem:[#allocation3] sm:$0xff]
    %v416 = vld [vmem:[#allocation3 + $0x8] sm:$0xff]
    %v417 = vld [vmem:[#allocation3 + $0x10] sm:$0xff]
    %v418 = vld [vmem:[#allocation3 + $0x18] sm:$0xff]
    %v419 = vld [vmem:[#allocation3 + $0x20] sm:$0xff]
    %v420 = vld [vmem:[#allocation3 + $0x28] sm:$0xff]
    %v421 = vld [vmem:[#allocation3 + $0x30] sm:$0xff]
    %v424 = vunpack.c.l.b16 %v413
    %v425 = vunpack.c.l.b16 %v414
    %v426 = vpack.c.b16 %v425, %v424
    %v428 = vsel %vm154, %v426, 0
    %430 = vmatprep.subr.bf16.mxu0 0
    %431 = vmatpush1.bf16.msra.mxu0 %v415
    %432 = vmatprep.subr.bf16.mxu0 0
    %433 = vmatpush1.bf16.msra.mxu0 %v416
    %434 = vmatprep.subr.bf16.mxu0 0
    %435 = vmatpush1.bf16.msra.mxu0 %v417
    %436 = vmatprep.subr.bf16.mxu0 0
    %437 = vmatpush1.bf16.msra.mxu0 %v418
    %438 = vmatprep.subr.bf16.mxu0 0
    %439 = vmatpush1.bf16.msra.mxu0 %v419
    %440 = vmatprep.subr.bf16.mxu0 0
    %441 = vmatpush1.bf16.msra.mxu0 %v420
    %442 = vmatprep.subr.bf16.mxu0 0
    %443 = vmatpush1.bf16.msra.mxu0 %v421
    %444 = vmatprep.subr.bf16.mxu0 0
    %445 = vmatpush1.bf16.msra.mxu0 0
    %446 = vmatprep.subr.bf16.mxu0 0
    %447 = vmatpush1.bf16.msra.mxu0 0
    %448 = vmatprep.subr.bf16.mxu0 0
    %449 = vmatpush1.bf16.msra.mxu0 0
    %450 = vmatprep.subr.bf16.mxu0 0
    %451 = vmatpush1.bf16.msra.mxu0 0
    %452 = vmatprep.subr.bf16.mxu0 0
    %453 = vmatpush1.bf16.msra.mxu0 0
    %454 = vmatprep.subr.bf16.mxu0 0
    %455 = vmatpush1.bf16.msra.mxu0 0
    %456 = vmatprep.subr.bf16.mxu0 0
    %457 = vmatpush1.bf16.msra.mxu0 0
    %458 = vmatprep.subr.bf16.mxu0 0
    %459 = vmatpush1.bf16.msra.mxu0 0
    %460 = vmatprep.subr.bf16.mxu0 0
    %461 = vmatpush1.bf16.msra.mxu0 0
    %462 = vmatprep.mubr.bf16.mxu0 0
    %463 = vmatmul.mubr.bf16.gmra.mrb[0].mxu0 %v428
    %v464 = vpop.f32.mrb[0].mxu0
    %v465 = vadd.f32 0.0, %v464
    %v466 = vpop.f32.mrb[0].mxu0
    %v467 = vpop.f32.mrb[0].mxu0
    %v468 = vadd.f32 0.0, %v467
    %v469 = vpop.f32.mrb[0].mxu0
    %470 = vdwg.mxu0
    %v471 = vld [vmem:[%s199] sm:$0xff]
    %v472 = vld [vmem:[%s199 + $0x8] sm:$0xff]
    %v473 = vld [vmem:[%s199 + $0x10] sm:$0xff]
    %v474 = vld [vmem:[%s199 + $0x18] sm:$0xff]
    %v475 = vld [vmem:[%s199 + $0x20] sm:$0xff]
    %v476 = vld [vmem:[%s199 + $0x28] sm:$0xff]
    %v477 = vld [vmem:[%s199 + $0x30] sm:$0xff]
    %478 = vmatprep.subr.bf16.mxu0 0
    %479 = vmatpush1.bf16.msra.mxu0 %v471
    %480 = vmatprep.subr.bf16.mxu0 0
    %481 = vmatpush1.bf16.msra.mxu0 %v472
    %482 = vmatprep.subr.bf16.mxu0 0
    %483 = vmatpush1.bf16.msra.mxu0 %v473
    %484 = vmatprep.subr.bf16.mxu0 0
    %485 = vmatpush1.bf16.msra.mxu0 %v474
    %486 = vmatprep.subr.bf16.mxu0 0
    %487 = vmatpush1.bf16.msra.mxu0 %v475
    %488 = vmatprep.subr.bf16.mxu0 0
    %489 = vmatpush1.bf16.msra.mxu0 %v476
    %490 = vmatprep.subr.bf16.mxu0 0
    %491 = vmatpush1.bf16.msra.mxu0 %v477
    %492 = vmatprep.subr.bf16.mxu0 0
    %493 = vmatpush1.bf16.msra.mxu0 0
    %494 = vmatprep.subr.bf16.mxu0 0
    %495 = vmatpush1.bf16.msra.mxu0 0
    %496 = vmatprep.subr.bf16.mxu0 0
    %497 = vmatpush1.bf16.msra.mxu0 0
    %498 = vmatprep.subr.bf16.mxu0 0
    %499 = vmatpush1.bf16.msra.mxu0 0
    %500 = vmatprep.subr.bf16.mxu0 0
    %501 = vmatpush1.bf16.msra.mxu0 0
    %502 = vmatprep.subr.bf16.mxu0 0
    %503 = vmatpush1.bf16.msra.mxu0 0
    %504 = vmatprep.subr.bf16.mxu0 0
    %505 = vmatpush1.bf16.msra.mxu0 0
    %506 = vmatprep.subr.bf16.mxu0 0
    %507 = vmatpush1.bf16.msra.mxu0 0
    %508 = vmatprep.subr.bf16.mxu0 0
    %509 = vmatpush1.bf16.msra.mxu0 0
    %510 = vmatprep.mubr.bf16.mxu0 0
    %511 = vmatmul.mubr.bf16.gmra.mrb[0].mxu0 %v428
    %v512 = vpop.f32.mrb[0].mxu0
    %v513 = vadd.f32 0.0, %v512
    %v514 = vpop.f32.mrb[0].mxu0
    %v515 = vpop.f32.mrb[0].mxu0
    %v516 = vadd.f32 0.0, %v515
    %v517 = vpop.f32.mrb[0].mxu0
    %518 = vdwg.mxu0
    %v519 = vsel %vm65, %v465, 0.0
    %v520 = vsel %vm65, %v513, 0.0
    %v521 = vadd.f32 %v519, %v520
    %522 = vadd.xlane.f32.xlu0 %v521
    %v523 = vpop.xlane.xlu0 %522
    %v524 = vsel %vm65, %v468, 0.0
    %v525 = vsel %vm65, %v516, 0.0
    %v526 = vadd.f32 %v524, %v525
    %527 = vadd.xlane.f32.xlu0 %v526
    %v528 = vpop.xlane.xlu0 %527
    %v529 = vmul.f32 %v523, %v258
    %v530 = vmul.f32 %v528, %v258
    %v531 = vsub.f32 %v465, %v529
    %v532 = vsub.f32 %v468, %v530
    %v533 = vsub.f32 %v513, %v529
    %v534 = vsub.f32 %v516, %v530
    %v535 = vmul.f32 %v531, %v531
    %v536 = vmul.f32 %v532, %v532
    %v537 = vmul.f32 %v533, %v533
    %v538 = vmul.f32 %v534, %v534
    %v539 = vsel %vm65, %v535, 0.0
    %v540 = vsel %vm65, %v537, 0.0
    %v541 = vadd.f32 %v539, %v540
    %542 = vadd.xlane.f32.xlu0 %v541
    %v543 = vpop.xlane.xlu0 %542
    %v544 = vsel %vm65, %v536, 0.0
    %v545 = vsel %vm65, %v538, 0.0
    %v546 = vadd.f32 %v544, %v545
    %547 = vadd.xlane.f32.xlu0 %v546
    %v548 = vpop.xlane.xlu0 %547
    %v549 = vmul.f32 %v543, %v258
    %v550 = vmul.f32 %v548, %v258
    %v551 = vadd.f32 %v549, 1e-05
    %v552 = vadd.f32 %v550, 1e-05
    %v553 = vrsqrt.pop %v551
    %v554 = vrsqrt.pop %v552
    %v555 = vmul.f32 %v531, %v553
    %v556 = vmul.f32 %v532, %v554
    %v557 = vmul.f32 %v533, %v553
    %v558 = vmul.f32 %v534, %v554
    %v559 = vld [vmem:[%s5] sm:$0xff]
    %v560 = vld [vmem:[%s5 + $0x8] sm:$0xff]
    %562 = vset.pattern.permute.xlu0 0
    %563 = vperm.xlu0 %562, %v559
    %v564 = vpop.permute.xlu0 %563
    %567 = vset.pattern.permute.xlu0 0
    %568 = vperm.xlu0 %567, %v560
    %v569 = vpop.permute.xlu0 %568
    %v571 = vmul.f32 %v555, %v564
    %v572 = vmul.f32 %v556, %v569
    %v573 = vmul.f32 %v557, %v564
    %v574 = vmul.f32 %v558, %v569
    %v575 = vld [vmem:[%s6] sm:$0xff]
    %v576 = vld [vmem:[%s6 + $0x8] sm:$0xff]
    %578 = vset.pattern.permute.xlu0 0
    %579 = vperm.xlu0 %578, %v575
    %v580 = vpop.permute.xlu0 %579
    %583 = vset.pattern.permute.xlu0 0
    %584 = vperm.xlu0 %583, %v576
    %v585 = vpop.permute.xlu0 %584
    %v587 = vadd.f32 %v571, %v580
    %v588 = vadd.f32 %v572, %v585
    %v589 = vadd.f32 %v573, %v580
    %v590 = vadd.f32 %v574, %v585
    %v591 = vmax.f32 %v587, 0.0
    %v592 = vmax.f32 %v588, 0.0
    %v593 = vmax.f32 %v589, 0.0
    %v594 = vmax.f32 %v590, 0.0
    %v595 = vld [vmem:[%s7] sm:$0x3]
    %v596 = vld [vmem:[%s8] sm:$0x3]
    %v597 = vld [vmem:[%s9] sm:$0xff]
    %v598 = vld [vmem:[%s9 + $0x8] sm:$0xff]
    %v599 = vld [vmem:[%s10] sm:$0xff]
    %v600 = vld [vmem:[%s10 + $0x8] sm:$0xff]
    %v601 = vsel %vm65, %v591, 0.0
    %602 = vadd.xlane.f32.xlu0 %v601
    %v603 = vpop.xlane.xlu0 %602
    %v604 = vsel %vm65, %v592, 0.0
    %605 = vadd.xlane.f32.xlu0 %v604
    %v606 = vpop.xlane.xlu0 %605
    %v607 = vrcp.pop 32.0
    %v608 = vmul.f32 %v603, %v607
    %v609 = vmul.f32 %v606, %v607
    %vm610 = vcmask 130048
    %v612 = vsel %vm610, %v595, 0
    %614 = vmatprep.subr.mxu0 0.0
    %615 = vmatpush1.msra.mxu0 %v608
    %616 = vmatprep.subr.mxu0 0.0
    %617 = vmatpush1.msra.mxu0 %v609
    %618 = vmatprep.subr.mxu0 0.0
    %619 = vmatpush1.msra.mxu0 0.0
    %620 = vmatprep.subr.mxu0 0.0
    %621 = vmatpush1.msra.mxu0 0.0
    %622 = vmatprep.subr.mxu0 0.0
    %623 = vmatpush1.msra.mxu0 0.0
    %624 = vmatprep.subr.mxu0 0.0
    %625 = vmatpush1.msra.mxu0 0.0
    %626 = vmatprep.subr.mxu0 0.0
    %627 = vmatpush1.msra.mxu0 0.0
    %628 = vmatprep.subr.mxu0 0.0
    %629 = vmatpush1.msra.mxu0 0.0
    %630 = vmatprep.subr.mxu0 0.0
    %631 = vmatpush1.msra.mxu0 0.0
    %632 = vmatprep.subr.mxu0 0.0
    %633 = vmatpush1.msra.mxu0 0.0
    %634 = vmatprep.subr.mxu0 0.0
    %635 = vmatpush1.msra.mxu0 0.0
    %636 = vmatprep.subr.mxu0 0.0
    %637 = vmatpush1.msra.mxu0 0.0
    %638 = vmatprep.subr.mxu0 0.0
    %639 = vmatpush1.msra.mxu0 0.0
    %640 = vmatprep.subr.mxu0 0.0
    %641 = vmatpush1.msra.mxu0 0.0
    %642 = vmatprep.subr.mxu0 0.0
    %643 = vmatpush1.msra.mxu0 0.0
    %644 = vmatprep.subr.mxu0 0.0
    %645 = vmatpush1.msra.mxu0 0.0
    %646 = vmatprep.subr.mxu0 0.0
    %647 = vmatpush1.msra.mxu0 0.0
    %648 = vmatprep.subr.mxu0 0.0
    %649 = vmatpush1.msra.mxu0 0.0
    %650 = vmatprep.subr.mxu0 0.0
    %651 = vmatpush1.msra.mxu0 0.0
    %652 = vmatprep.subr.mxu0 0.0
    %653 = vmatpush1.msra.mxu0 0.0
    %654 = vmatprep.subr.mxu0 0.0
    %655 = vmatpush1.msra.mxu0 0.0
    %656 = vmatprep.subr.mxu0 0.0
    %657 = vmatpush1.msra.mxu0 0.0
    %658 = vmatprep.subr.mxu0 0.0
    %659 = vmatpush1.msra.mxu0 0.0
    %660 = vmatprep.subr.mxu0 0.0
    %661 = vmatpush1.msra.mxu0 0.0
    %662 = vmatprep.subr.mxu0 0.0
    %663 = vmatpush1.msra.mxu0 0.0
    %664 = vmatprep.subr.mxu0 0.0
    %665 = vmatpush1.msra.mxu0 0.0
    %666 = vmatprep.subr.mxu0 0.0
    %667 = vmatpush1.msra.mxu0 0.0
    %668 = vmatprep.subr.mxu0 0.0
    %669 = vmatpush1.msra.mxu0 0.0
    %670 = vmatprep.subr.mxu0 0.0
    %671 = vmatpush1.msra.mxu0 0.0
    %672 = vmatprep.subr.mxu0 0.0
    %673 = vmatpush1.msra.mxu0 0.0
    %674 = vmatprep.subr.mxu0 0.0
    %675 = vmatpush1.msra.mxu0 0.0
    %676 = vmatprep.subr.mxu0 0.0
    %677 = vmatpush1.msra.mxu0 0.0
    %678 = vmatprep.mubr.f32.mxu0 0.0
    %679 = vmatmul.mubr.f32.gmra.mrb[0].mxu0 %v612
    %v680 = vpop.f32.mrb[0].mxu0
    %v681 = vadd.f32 %v596, %v680
    %v682 = vpop.f32.mrb[0].mxu0
    %683 = vdwg.mxu0
    %v684 = vmax.f32 %v681, 0.0
    %vm685 = vcmask 15360
    %v687 = vsel %vm685, %v597, 0
    %v690 = vsel %vm685, %v598, 0
    %vm692 = vcmask 1041408
    %v694 = vsel %vm692, %v684, 0
    %696 = vmatprep.subr.mxu0 0.0
    %697 = vmatpush1.msra.mxu0 %v694
    %698 = vmatprep.subr.mxu0 0.0
    %699 = vmatpush1.msra.mxu0 0.0
    %700 = vmatprep.subr.mxu0 0.0
    %701 = vmatpush1.msra.mxu0 0.0
    %702 = vmatprep.subr.mxu0 0.0
    %703 = vmatpush1.msra.mxu0 0.0
    %704 = vmatprep.subr.mxu0 0.0
    %705 = vmatpush1.msra.mxu0 0.0
    %706 = vmatprep.subr.mxu0 0.0
    %707 = vmatpush1.msra.mxu0 0.0
    %708 = vmatprep.subr.mxu0 0.0
    %709 = vmatpush1.msra.mxu0 0.0
    %710 = vmatprep.subr.mxu0 0.0
    %711 = vmatpush1.msra.mxu0 0.0
    %712 = vmatprep.subr.mxu0 0.0
    %713 = vmatpush1.msra.mxu0 0.0
    %714 = vmatprep.subr.mxu0 0.0
    %715 = vmatpush1.msra.mxu0 0.0
    %716 = vmatprep.subr.mxu0 0.0
    %717 = vmatpush1.msra.mxu0 0.0
    %718 = vmatprep.subr.mxu0 0.0
    %719 = vmatpush1.msra.mxu0 0.0
    %720 = vmatprep.subr.mxu0 0.0
    %721 = vmatpush1.msra.mxu0 0.0
    %722 = vmatprep.subr.mxu0 0.0
    %723 = vmatpush1.msra.mxu0 0.0
    %724 = vmatprep.subr.mxu0 0.0
    %725 = vmatpush1.msra.mxu0 0.0
    %726 = vmatprep.subr.mxu0 0.0
    %727 = vmatpush1.msra.mxu0 0.0
    %728 = vmatprep.subr.mxu0 0.0
    %729 = vmatpush1.msra.mxu0 0.0
    %730 = vmatprep.subr.mxu0 0.0
    %731 = vmatpush1.msra.mxu0 0.0
    %732 = vmatprep.subr.mxu0 0.0
    %733 = vmatpush1.msra.mxu0 0.0
    %734 = vmatprep.subr.mxu0 0.0
    %735 = vmatpush1.msra.mxu0 0.0
    %736 = vmatprep.subr.mxu0 0.0
    %737 = vmatpush1.msra.mxu0 0.0
    %738 = vmatprep.subr.mxu0 0.0
    %739 = vmatpush1.msra.mxu0 0.0
    %740 = vmatprep.subr.mxu0 0.0
    %741 = vmatpush1.msra.mxu0 0.0
    %742 = vmatprep.subr.mxu0 0.0
    %743 = vmatpush1.msra.mxu0 0.0
    %744 = vmatprep.subr.mxu0 0.0
    %745 = vmatpush1.msra.mxu0 0.0
    %746 = vmatprep.subr.mxu0 0.0
    %747 = vmatpush1.msra.mxu0 0.0
    %748 = vmatprep.subr.mxu0 0.0
    %749 = vmatpush1.msra.mxu0 0.0
    %750 = vmatprep.subr.mxu0 0.0
    %751 = vmatpush1.msra.mxu0 0.0
    %752 = vmatprep.subr.mxu0 0.0
    %753 = vmatpush1.msra.mxu0 0.0
    %754 = vmatprep.subr.mxu0 0.0
    %755 = vmatpush1.msra.mxu0 0.0
    %756 = vmatprep.subr.mxu0 0.0
    %757 = vmatpush1.msra.mxu0 0.0
    %758 = vmatprep.subr.mxu0 0.0
    %759 = vmatpush1.msra.mxu0 0.0
    %760 = vmatprep.mubr.f32.mxu0 0.0
    %761 = vmatmul.mubr.f32.gmra.mrb[0].mxu0 %v687
    %v762 = vpop.f32.mrb[0].mxu0
    %v763 = vadd.f32 %v599, %v762
    %v764 = vpop.f32.mrb[0].mxu0
    %765 = vmatprep.mubr.f32.mxu0 0.0
    %766 = vmatmul.mubr.f32.gmra.mrb[0].mxu0 %v690
    %v767 = vpop.f32.mrb[0].mxu0
    %v768 = vadd.f32 %v600, %v767
    %v769 = vpop.f32.mrb[0].mxu0
    %770 = vdwg.mxu0
    %v771 = vxor.u32 %v763, 2147483648
    %v772 = vxor.u32 %v768, 2147483648
    %v773 = vmul.f32 %v771, 1.442695
    %v774 = vpow.pop %v773
    %v775 = vmul.f32 %v772, 1.442695
    %v776 = vpow.pop %v775
    %v777 = vadd.f32 %v774, 1.0
    %v778 = vadd.f32 %v776, 1.0
    %v779 = vrcp.pop %v777
    %v780 = vmul.f32 1.0, %v779
    %v781 = vrcp.pop %v778
    %v782 = vmul.f32 1.0, %v781
    %v783 = vsel %vm65, %v593, 0.0
    %784 = vadd.xlane.f32.xlu0 %v783
    %v785 = vpop.xlane.xlu0 %784
    %v786 = vsel %vm65, %v594, 0.0
    %787 = vadd.xlane.f32.xlu0 %v786
    %v788 = vpop.xlane.xlu0 %787
    %v789 = vmul.f32 %v785, %v607
    %v790 = vmul.f32 %v788, %v607
    %791 = vmatprep.subr.mxu0 0.0
    %792 = vmatpush1.msra.mxu0 %v789
    %793 = vmatprep.subr.mxu0 0.0
    %794 = vmatpush1.msra.mxu0 %v790
    %795 = vmatprep.subr.mxu0 0.0
    %796 = vmatpush1.msra.mxu0 0.0
    %797 = vmatprep.subr.mxu0 0.0
    %798 = vmatpush1.msra.mxu0 0.0
    %799 = vmatprep.subr.mxu0 0.0
    %800 = vmatpush1.msra.mxu0 0.0
    %801 = vmatprep.subr.mxu0 0.0
    %802 = vmatpush1.msra.mxu0 0.0
    %803 = vmatprep.subr.mxu0 0.0
    %804 = vmatpush1.msra.mxu0 0.0
    %805 = vmatprep.subr.mxu0 0.0
    %806 = vmatpush1.msra.mxu0 0.0
    %807 = vmatprep.subr.mxu0 0.0
    %808 = vmatpush1.msra.mxu0 0.0
    %809 = vmatprep.subr.mxu0 0.0
    %810 = vmatpush1.msra.mxu0 0.0
    %811 = vmatprep.subr.mxu0 0.0
    %812 = vmatpush1.msra.mxu0 0.0
    %813 = vmatprep.subr.mxu0 0.0
    %814 = vmatpush1.msra.mxu0 0.0
    %815 = vmatprep.subr.mxu0 0.0
    %816 = vmatpush1.msra.mxu0 0.0
    %817 = vmatprep.subr.mxu0 0.0
    %818 = vmatpush1.msra.mxu0 0.0
    %819 = vmatprep.subr.mxu0 0.0
    %820 = vmatpush1.msra.mxu0 0.0
    %821 = vmatprep.subr.mxu0 0.0
    %822 = vmatpush1.msra.mxu0 0.0
    %823 = vmatprep.subr.mxu0 0.0
    %824 = vmatpush1.msra.mxu0 0.0
    %825 = vmatprep.subr.mxu0 0.0
    %826 = vmatpush1.msra.mxu0 0.0
    %827 = vmatprep.subr.mxu0 0.0
    %828 = vmatpush1.msra.mxu0 0.0
    %829 = vmatprep.subr.mxu0 0.0
    %830 = vmatpush1.msra.mxu0 0.0
    %831 = vmatprep.subr.mxu0 0.0
    %832 = vmatpush1.msra.mxu0 0.0
    %833 = vmatprep.subr.mxu0 0.0
    %834 = vmatpush1.msra.mxu0 0.0
    %835 = vmatprep.subr.mxu0 0.0
    %836 = vmatpush1.msra.mxu0 0.0
    %837 = vmatprep.subr.mxu0 0.0
    %838 = vmatpush1.msra.mxu0 0.0
    %839 = vmatprep.subr.mxu0 0.0
    %840 = vmatpush1.msra.mxu0 0.0
    %841 = vmatprep.subr.mxu0 0.0
    %842 = vmatpush1.msra.mxu0 0.0
    %843 = vmatprep.subr.mxu0 0.0
    %844 = vmatpush1.msra.mxu0 0.0
    %845 = vmatprep.subr.mxu0 0.0
    %846 = vmatpush1.msra.mxu0 0.0
    %847 = vmatprep.subr.mxu0 0.0
    %848 = vmatpush1.msra.mxu0 0.0
    %849 = vmatprep.subr.mxu0 0.0
    %850 = vmatpush1.msra.mxu0 0.0
    %851 = vmatprep.subr.mxu0 0.0
    %852 = vmatpush1.msra.mxu0 0.0
    %853 = vmatprep.subr.mxu0 0.0
    %854 = vmatpush1.msra.mxu0 0.0
    %855 = vmatprep.mubr.f32.mxu0 0.0
    %856 = vmatmul.mubr.f32.gmra.mrb[0].mxu0 %v612
    %v857 = vpop.f32.mrb[0].mxu0
    %v858 = vadd.f32 %v596, %v857
    %v859 = vpop.f32.mrb[0].mxu0
    %860 = vdwg.mxu0
    %v861 = vmax.f32 %v858, 0.0
    %v863 = vsel %vm692, %v861, 0
    %865 = vmatprep.subr.mxu0 0.0
    %866 = vmatpush1.msra.mxu0 %v863
    %867 = vmatprep.subr.mxu0 0.0
    %868 = vmatpush1.msra.mxu0 0.0
    %869 = vmatprep.subr.mxu0 0.0
    %870 = vmatpush1.msra.mxu0 0.0
    %871 = vmatprep.subr.mxu0 0.0
    %872 = vmatpush1.msra.mxu0 0.0
    %873 = vmatprep.subr.mxu0 0.0
    %874 = vmatpush1.msra.mxu0 0.0
    %875 = vmatprep.subr.mxu0 0.0
    %876 = vmatpush1.msra.mxu0 0.0
    %877 = vmatprep.subr.mxu0 0.0
    %878 = vmatpush1.msra.mxu0 0.0
    %879 = vmatprep.subr.mxu0 0.0
    %880 = vmatpush1.msra.mxu0 0.0
    %881 = vmatprep.subr.mxu0 0.0
    %882 = vmatpush1.msra.mxu0 0.0
    %883 = vmatprep.subr.mxu0 0.0
    %884 = vmatpush1.msra.mxu0 0.0
    %885 = vmatprep.subr.mxu0 0.0
    %886 = vmatpush1.msra.mxu0 0.0
    %887 = vmatprep.subr.mxu0 0.0
    %888 = vmatpush1.msra.mxu0 0.0
    %889 = vmatprep.subr.mxu0 0.0
    %890 = vmatpush1.msra.mxu0 0.0
    %891 = vmatprep.subr.mxu0 0.0
    %892 = vmatpush1.msra.mxu0 0.0
    %893 = vmatprep.subr.mxu0 0.0
    %894 = vmatpush1.msra.mxu0 0.0
    %895 = vmatprep.subr.mxu0 0.0
    %896 = vmatpush1.msra.mxu0 0.0
    %897 = vmatprep.subr.mxu0 0.0
    %898 = vmatpush1.msra.mxu0 0.0
    %899 = vmatprep.subr.mxu0 0.0
    %900 = vmatpush1.msra.mxu0 0.0
    %901 = vmatprep.subr.mxu0 0.0
    %902 = vmatpush1.msra.mxu0 0.0
    %903 = vmatprep.subr.mxu0 0.0
    %904 = vmatpush1.msra.mxu0 0.0
    %905 = vmatprep.subr.mxu0 0.0
    %906 = vmatpush1.msra.mxu0 0.0
    %907 = vmatprep.subr.mxu0 0.0
    %908 = vmatpush1.msra.mxu0 0.0
    %909 = vmatprep.subr.mxu0 0.0
    %910 = vmatpush1.msra.mxu0 0.0
    %911 = vmatprep.subr.mxu0 0.0
    %912 = vmatpush1.msra.mxu0 0.0
    %913 = vmatprep.subr.mxu0 0.0
    %914 = vmatpush1.msra.mxu0 0.0
    %915 = vmatprep.subr.mxu0 0.0
    %916 = vmatpush1.msra.mxu0 0.0
    %917 = vmatprep.subr.mxu0 0.0
    %918 = vmatpush1.msra.mxu0 0.0
    %919 = vmatprep.subr.mxu0 0.0
    %920 = vmatpush1.msra.mxu0 0.0
    %921 = vmatprep.subr.mxu0 0.0
    %922 = vmatpush1.msra.mxu0 0.0
    %923 = vmatprep.subr.mxu0 0.0
    %924 = vmatpush1.msra.mxu0 0.0
    %925 = vmatprep.subr.mxu0 0.0
    %926 = vmatpush1.msra.mxu0 0.0
    %927 = vmatprep.subr.mxu0 0.0
    %928 = vmatpush1.msra.mxu0 0.0
    %929 = vmatprep.mubr.f32.mxu0 0.0
    %930 = vmatmul.mubr.f32.gmra.mrb[0].mxu0 %v687
    %v931 = vpop.f32.mrb[0].mxu0
    %v932 = vadd.f32 %v599, %v931
    %v933 = vpop.f32.mrb[0].mxu0
    %934 = vmatprep.mubr.f32.mxu0 0.0
    %935 = vmatmul.mubr.f32.gmra.mrb[0].mxu0 %v690
    %v936 = vpop.f32.mrb[0].mxu0
    %v937 = vadd.f32 %v600, %v936
    %v938 = vpop.f32.mrb[0].mxu0
    %939 = vdwg.mxu0
    %v940 = vxor.u32 %v932, 2147483648
    %v941 = vxor.u32 %v937, 2147483648
    %v942 = vmul.f32 %v940, 1.442695
    %v943 = vpow.pop %v942
    %v944 = vmul.f32 %v941, 1.442695
    %v945 = vpow.pop %v944
    %v946 = vadd.f32 %v943, 1.0
    %v947 = vadd.f32 %v945, 1.0
    %v948 = vrcp.pop %v946
    %v949 = vmul.f32 1.0, %v948
    %v950 = vrcp.pop %v947
    %v951 = vmul.f32 1.0, %v950
    %v952 = vld [vmem:[%s0] sm:$0xff]
    %v953 = vld [vmem:[%s0 + $0x8] sm:$0xff]
    %v954 = vld [vmem:[%s0 + $0x10] sm:$0xff]
    %v955 = vld [vmem:[%s0 + $0x18] sm:$0xff]
    %v956 = vadd.f32 %v952, %v591
    %v957 = vadd.f32 %v953, %v592
    %v958 = vadd.f32 %v954, %v593
    %v959 = vadd.f32 %v955, %v594
    %961 = vset.pattern.permute.xlu0 0
    %962 = vperm.xlu0 %961, %v780
    %v963 = vpop.permute.xlu0 %962
    %966 = vset.pattern.permute.xlu0 0
    %967 = vperm.xlu0 %966, %v782
    %v968 = vpop.permute.xlu0 %967
    %971 = vset.pattern.permute.xlu0 0
    %972 = vperm.xlu0 %971, %v949
    %v973 = vpop.permute.xlu0 %972
    %976 = vset.pattern.permute.xlu0 0
    %977 = vperm.xlu0 %976, %v951
    %v978 = vpop.permute.xlu0 %977
    %v980 = vadd.f32 %v956, %v963
    %v981 = vadd.f32 %v957, %v968
    %v982 = vadd.f32 %v958, %v973
    %v983 = vadd.f32 %v959, %v978
    %984 = vst.msk [vmem:[#allocation4] sm:$0xff] %vm65, %v980
    %985 = vst.msk [vmem:[#allocation4 + $0x8] sm:$0xff] %vm65, %v981
    %986 = vst.msk [vmem:[#allocation4 + $0x10] sm:$0xff] %vm65, %v982
    %987 = vst.msk [vmem:[#allocation4 + $0x18] sm:$0xff] %vm65, %v983
    // Predicated region
    $region46: #{re_block_forward.1} parent=1 // pred_check
      _
    $region47: #{re_block_forward.1} parent=1 // pred_check_branch
      %989 = sbr.rel (0) target = $region49
    $region48: #{re_block_forward.1} parent=1 // pred_region
      %s991 = ssub.s32 512, 512
      %992 = vsyncadd [#allocation5], %s991
      %s993 = sshll.u32 [#allocation4], 4
      %s994 = int_to_ptr.vmem [resolvable:$true] %s993
      %999 = dma.vmem_to_hbm [thread:$0]  %s994, 512, %s11, [#allocation5], 128, 128, 8
    $region49: #{re_block_forward.1} parent=1 // pred_fallthru
      _
    // Predicated region
    $region50: #{re_block_forward.1} parent=1 // pred_check
      _
    $region51: #{re_block_forward.1} parent=1 // pred_check_branch
      %1001 = sbr.rel (0) target = $region53
    $region52: #{re_block_forward.1} parent=1 // pred_region
      %1002 = dma.done [#allocation5], 512
    $region53: #{re_block_forward.1} parent=1 // pred_fallthru
      _
    %1003 = vsyncpa [#allocation5], 1

</llo_original>
